<compile_context>
chip_gen: v7x
topology: tpu7x:2x2x1
jax: 0.10.0
libtpu: 0.0.40
codegen_flags: <defaults>
</compile_context>

<pallas_src>
import functools

import jax
import jax.numpy as jnp
from jax.experimental import pallas as pl
from jax.experimental.pallas import tpu as pltpu

EPS = 1e-5  # torch.nn.LayerNorm default

# Flipped to False at runtime if this jax build rejects Buffered(1) lowering.
_STATE = {"single_buffer_resident": True}


def _round_up(n, m):
    return ((n + m - 1) // m) * m


def _pick_block_m(R, *, max_block_m=1024, min_steps=8):
    """Row-tile heuristic:
      * tiles of 512-1024 rows reach ~85-86% of the HBM roofline on this
        mem-bound kernel (vs ~63% at 256) by amortizing per-step overhead,
      * but keep >= min_steps grid steps so double-buffering has DMA/compute
        to overlap and both v7x TensorCores get several steps each.
    """
    bm = max(8, pl.cdiv(R, min_steps))
    bm = min(bm, max_block_m, _round_up(R, 8))
    return _round_up(bm, 8)


def _resident_spec(block_shape, single_buffer):
    """BlockSpec for grid-invariant operands (weight / gamma / beta / bias).

    Single-buffered when supported: their index_map never changes, so default
    double-buffering only wastes VMEM (relevant once the weight gets big on
    v7x's 64 MiB VMEM).
    """
    index_map = lambda i: (0, 0)
    if single_buffer:
        try:
            return pl.BlockSpec(block_shape, index_map,
                                pipeline_mode=pl.Buffered(1))
        except Exception:  # older jax without pipeline_mode / Buffered
            pass
    return pl.BlockSpec(block_shape, index_map)


# --------------------------------------------------------------------------
# Fused PreNorm(+Linear) kernel: one grid step handles a (block_m, D) row tile.
#   1. LayerNorm stats + normalize + affine (f32; biased variance like torch)
#   2. bf16 matmul with the resident (D, H) weight (MXU, f32 accumulate)
#   3. bias add + cast, lane-dense (block_m, H) store
# --------------------------------------------------------------------------
def _prenorm_linear_kernel(x_ref, g_ref, b_ref, w_ref, wb_ref, o_ref):
    x = x_ref[...].astype(jnp.float32)                       # (block_m, D)
    mean = jnp.mean(x, axis=-1, keepdims=True)
    xc = x - mean
    var = jnp.mean(xc * xc, axis=-1, keepdims=True)          # biased, like torch
    inv = jax.lax.rsqrt(var + EPS)
    y = xc * inv * g_ref[...].astype(jnp.float32) + b_ref[...].astype(jnp.float32)
    acc = jnp.dot(y.astype(jnp.bfloat16), w_ref[...],
                  preferred_element_type=jnp.float32)        # (block_m, H)
    o_ref[...] = (acc + wb_ref[...].astype(jnp.float32)).astype(o_ref.dtype)


@functools.lru_cache(maxsize=None)
def _build_prenorm_linear(R, D, H, block_m, out_dtype, single_buffer):
    return pl.pallas_call(
        _prenorm_linear_kernel,
        out_shape=jax.ShapeDtypeStruct((R, H), out_dtype),
        grid_spec=pltpu.PrefetchScalarGridSpec(
            num_scalar_prefetch=0,
            grid=(pl.cdiv(R, block_m),),        # no pad: partial last block masked
            in_specs=[
                pl.BlockSpec((block_m, D), lambda i: (i, 0)),      # x rows (2-buf)
                _resident_spec((1, D), single_buffer),             # gamma
                _resident_spec((1, D), single_buffer),             # beta
                _resident_spec((D, H), single_buffer),             # weight (resident)
                _resident_spec((1, H), single_buffer),             # bias
            ],
            out_specs=pl.BlockSpec((block_m, H), lambda i: (i, 0)),
        ),
        compiler_params=pltpu.CompilerParams(
            dimension_semantics=("parallel",)),   # megacore-shardable
    )


def prenorm_linear_pallas(x2d, g2d, b2d, w_bf, wb2d, *, block_m=None,
                          out_dtype=None):
    """Fused fn(LayerNorm(x)) where fn = Linear(D -> H).

    x2d: (R, D).  g2d/b2d: (1, D) f32.  w_bf: (D, H) bf16.  wb2d: (1, H) f32.
    out_dtype=None keeps x2d.dtype (torch parity); pass jnp.bfloat16 to halve
    the output byte stream if the dtype contract allows.
    """
    R, D = x2d.shape
    H = w_bf.shape[1]
    if block_m is None:
        block_m = _pick_block_m(R)
    out_dtype = jnp.dtype(x2d.dtype if out_dtype is None else out_dtype)
    args = (x2d, g2d, b2d, w_bf, wb2d)
    if _STATE["single_buffer_resident"]:
        try:
            return _build_prenorm_linear(R, D, H, block_m, out_dtype, True)(*args)
        except Exception:
            _STATE["single_buffer_resident"] = False   # fall back, double-buffered
    return _build_prenorm_linear(R, D, H, block_m, out_dtype, False)(*args)


# --------------------------------------------------------------------------
# Standalone tiled LayerNorm kernel (generic-`fn` fallback path).
# --------------------------------------------------------------------------
def _layernorm_kernel(x_ref, g_ref, b_ref, o_ref):
    x = x_ref[...].astype(jnp.float32)
    mean = jnp.mean(x, axis=-1, keepdims=True)
    xc = x - mean
    var = jnp.mean(xc * xc, axis=-1, keepdims=True)
    inv = jax.lax.rsqrt(var + EPS)
    y = xc * inv * g_ref[...].astype(jnp.float32) + b_ref[...].astype(jnp.float32)
    o_ref[...] = y.astype(o_ref.dtype)


@functools.lru_cache(maxsize=None)
def _build_layernorm(R, D, block_m, out_dtype, single_buffer):
    return pl.pallas_call(
        _layernorm_kernel,
        out_shape=jax.ShapeDtypeStruct((R, D), out_dtype),
        grid_spec=pltpu.PrefetchScalarGridSpec(
            num_scalar_prefetch=0,
            grid=(pl.cdiv(R, block_m),),
            in_specs=[
                pl.BlockSpec((block_m, D), lambda i: (i, 0)),
                _resident_spec((1, D), single_buffer),
                _resident_spec((1, D), single_buffer),
            ],
            out_specs=pl.BlockSpec((block_m, D), lambda i: (i, 0)),
        ),
        compiler_params=pltpu.CompilerParams(
            dimension_semantics=("parallel",)),
    )


def layernorm_pallas(x2d, g2d, b2d, *, block_m=None):
    R, D = x2d.shape
    if block_m is None:
        block_m = _pick_block_m(R)
    out_dtype = jnp.dtype(x2d.dtype)
    args = (x2d, g2d, b2d)
    if _STATE["single_buffer_resident"]:
        try:
            return _build_layernorm(R, D, block_m, out_dtype, True)(*args)
        except Exception:
            _STATE["single_buffer_resident"] = False
    return _build_layernorm(R, D, block_m, out_dtype, False)(*args)


# --------------------------------------------------------------------------
# PreNorm wrapper: fn(LayerNorm(x)).
#   * If `fn` is a Linear (linear_w/linear_b given), use the fused one-kernel
#     path (normalized intermediate never touches HBM).
#   * Otherwise run the tiled LayerNorm kernel and apply the user `fn`.
# Parameter prep (bf16 weight cast, (1,D)/(1,H) reshapes) happens ONCE here
# so the per-call hot path is kernel-only.
# --------------------------------------------------------------------------
class PreNormPallas:
    def __init__(self, dim, gamma, beta, *, fn=None, linear_w=None,
                 linear_b=None, block_m=None, out_dtype=None):
        self.dim = dim
        self.g2d = jnp.asarray(gamma, jnp.float32).reshape(1, dim)
        self.b2d = jnp.asarray(beta, jnp.float32).reshape(1, dim)
        self.fn = fn
        self.block_m = block_m
        self.out_dtype = out_dtype
        if linear_w is not None:
            self.w_bf = jnp.asarray(linear_w, jnp.bfloat16)     # cast once
            H = self.w_bf.shape[1]
            lb = jnp.zeros((H,), jnp.float32) if linear_b is None else linear_b
            self.wb2d = jnp.asarray(lb, jnp.float32).reshape(1, H)
        else:
            self.w_bf = None
            self.wb2d = None

    def __call__(self, x, **kwargs):
        *lead, D = x.shape
        assert D == self.dim
        R = 1
        for d in lead:
            R *= d
        x2d = x.reshape(R, D)
        if self.w_bf is not None:
            out = prenorm_linear_pallas(x2d, self.g2d, self.b2d, self.w_bf,
                                        self.wb2d, block_m=self.block_m,
                                        out_dtype=self.out_dtype)
            return out.reshape(*lead, self.w_bf.shape[1])
        normed = layernorm_pallas(x2d, self.g2d, self.b2d, block_m=self.block_m)
        return self.fn(normed.reshape(*lead, D), **kwargs)


if __name__ == "__main__":
    key = jax.random.PRNGKey(0)
    k_x, k_g, k_b, k_w, k_wb = jax.random.split(key, 5)

    # Small but TPU-shaped: D (LN axis) lane-dense at 128, H lane-dense at 256,
    # B*S = 512 rows -> auto block_m = 64 -> 8 grid steps (pipelined, megacore).
    B, S, D, H = 2, 256, 128, 256
    x = jax.random.normal(k_x, (B, S, D), dtype=jnp.float32)

    gamma = 1.0 + 0.1 * jax.random.normal(k_g, (D,), dtype=jnp.float32)
    beta = 0.1 * jax.random.normal(k_b, (D,), dtype=jnp.float32)
    w = jax.random.normal(k_w, (D, H), dtype=jnp.float32) / jnp.sqrt(D)
    wb = 0.1 * jax.random.normal(k_wb, (H,), dtype=jnp.float32)

    # Reference LN (torch.nn.LayerNorm semantics: biased variance, eps in rsqrt).
    mean = jnp.mean(x, axis=-1, keepdims=True)
    var = jnp.mean((x - mean) ** 2, axis=-1, keepdims=True)
    ref_norm = (x - mean) * jax.lax.rsqrt(var + EPS) * gamma + beta

    # --- fused PreNorm + Linear path -------------------------------------
    prenorm_lin = PreNormPallas(D, gamma, beta, linear_w=w, linear_b=wb)
    out = jax.block_until_ready(prenorm_lin(x))
    ref = jnp.einsum("bsd,dh->bsh", ref_norm, w) + wb
    assert out.shape == (B, S, H)
    # bf16 MXU inputs (f32 accumulate) -> loosened tolerance vs f32 reference.
    assert jnp.allclose(out, ref, atol=3e-2, rtol=3e-2), float(
        jnp.max(jnp.abs(out - ref)))

    # --- padding-free masked partial last block (R not a tile multiple) --
    x_odd = x[:, : S - 3, :]
    out_odd = jax.block_until_ready(prenorm_lin(x_odd))
    ref_odd = jnp.einsum("bsd,dh->bsh", ref_norm[:, : S - 3, :], w) + wb
    assert out_odd.shape == (B, S - 3, H)
    assert jnp.allclose(out_odd, ref_odd, atol=3e-2, rtol=3e-2)

    # --- optional bf16 output (halves the dominant HBM byte stream) ------
    prenorm_bf16 = PreNormPallas(D, gamma, beta, linear_w=w, linear_b=wb,
                                 out_dtype=jnp.bfloat16)
    out_bf16 = jax.block_until_ready(prenorm_bf16(x))
    assert out_bf16.dtype == jnp.bfloat16
    assert jnp.allclose(out_bf16.astype(jnp.float32), ref, atol=1e-1, rtol=1e-1)

    # --- generic-fn path (standalone LN kernel, user fn applied outside) -
    prenorm_gen = PreNormPallas(D, gamma, beta, fn=jax.nn.gelu)
    out_gen = jax.block_until_ready(prenorm_gen(x))
    ref_gen = jax.nn.gelu(ref_norm)
    assert jnp.allclose(out_gen, ref_gen, atol=1e-4, rtol=1e-4), float(
        jnp.max(jnp.abs(out_gen - ref_gen)))

    print("KERNEL_OK")
</pallas_src>

<mosaic_0001>
module attributes {stable_mosaic.version = 11 : i64} {
  func.func @_prenorm_linear_kernel(%arg0: i32, %arg1: memref<64x128xf32, #tpu.memory_space<vmem>>, %arg2: memref<1x128xf32, #tpu.memory_space<vmem>>, %arg3: memref<1x128xf32, #tpu.memory_space<vmem>>, %arg4: memref<128x256xbf16, #tpu.memory_space<vmem>>, %arg5: memref<1x256xf32, #tpu.memory_space<vmem>>, %arg6: memref<64x256xf32, #tpu.memory_space<vmem>>) attributes {dimension_semantics = [#tpu.dimension_semantics<parallel>], iteration_bounds = array<i64: 8>, scalar_prefetch = 0 : i64, scratch_operands = 0 : i64, tpu.core_type = #tpu.core_type<tc>, window_params = [{transform_indices = @transform_0, window_bounds = array<i64: 64, 128>}, {pipeline_mode = #tpu.pipeline_mode<synchronous>, transform_indices = @transform_1, window_bounds = array<i64: 1, 128>}, {pipeline_mode = #tpu.pipeline_mode<synchronous>, transform_indices = @transform_2, window_bounds = array<i64: 1, 128>}, {pipeline_mode = #tpu.pipeline_mode<synchronous>, transform_indices = @transform_3, window_bounds = array<i64: 128, 256>}, {pipeline_mode = #tpu.pipeline_mode<synchronous>, transform_indices = @transform_4, window_bounds = array<i64: 1, 256>}, {transform_indices = @transform_5, window_bounds = array<i64: 64, 256>}]} {
    %c0 = arith.constant 0 : index
    %c0_0 = arith.constant 0 : index
    %0 = vector.load %arg1[%c0, %c0_0] : memref<64x128xf32, #tpu.memory_space<vmem>>, vector<64x128xf32>
    %cst = arith.constant dense<0.000000e+00> : vector<64xf32>
    %1 = vector.multi_reduction <add>, %0, %cst [1] : vector<64x128xf32> to vector<64xf32>
    %2 = vector.shape_cast %1 : vector<64xf32> to vector<64x1xf32>
    %cst_1 = arith.constant 1.280000e+02 : f32
    %3 = vector.broadcast %cst_1 : f32 to vector<64x1xf32>
    %4 = arith.divf %2, %3 : vector<64x1xf32>
    %5 = vector.broadcast %4 : vector<64x1xf32> to vector<64x128xf32>
    %6 = arith.subf %0, %5 : vector<64x128xf32>
    %7 = arith.mulf %6, %6 : vector<64x128xf32>
    %cst_2 = arith.constant dense<0.000000e+00> : vector<64xf32>
    %8 = vector.multi_reduction <add>, %7, %cst_2 [1] : vector<64x128xf32> to vector<64xf32>
    %9 = vector.shape_cast %8 : vector<64xf32> to vector<64x1xf32>
    %cst_3 = arith.constant 1.280000e+02 : f32
    %10 = vector.broadcast %cst_3 : f32 to vector<64x1xf32>
    %11 = arith.divf %9, %10 : vector<64x1xf32>
    %cst_4 = arith.constant 9.99999974E-6 : f32
    %12 = vector.broadcast %cst_4 : f32 to vector<64x1xf32>
    %13 = arith.addf %11, %12 : vector<64x1xf32>
    %14 = math.rsqrt %13 : vector<64x1xf32>
    %15 = vector.broadcast %14 : vector<64x1xf32> to vector<64x128xf32>
    %16 = arith.mulf %6, %15 : vector<64x128xf32>
    %c0_5 = arith.constant 0 : index
    %c0_6 = arith.constant 0 : index
    %17 = vector.load %arg2[%c0_5, %c0_6] : memref<1x128xf32, #tpu.memory_space<vmem>>, vector<1x128xf32>
    %18 = vector.broadcast %17 : vector<1x128xf32> to vector<64x128xf32>
    %19 = arith.mulf %16, %18 : vector<64x128xf32>
    %c0_7 = arith.constant 0 : index
    %c0_8 = arith.constant 0 : index
    %20 = vector.load %arg3[%c0_7, %c0_8] : memref<1x128xf32, #tpu.memory_space<vmem>>, vector<1x128xf32>
    %21 = vector.broadcast %20 : vector<1x128xf32> to vector<64x128xf32>
    %22 = arith.addf %19, %21 : vector<64x128xf32>
    %23 = arith.truncf %22 : vector<64x128xf32> to vector<64x128xbf16>
    %c0_9 = arith.constant 0 : index
    %c0_10 = arith.constant 0 : index
    %24 = vector.load %arg4[%c0_9, %c0_10] : memref<128x256xbf16, #tpu.memory_space<vmem>>, vector<128x256xbf16>
    %cst_11 = arith.constant dense<0.000000e+00> : vector<64x256xf32>
    %25 = tpu.matmul %23, %24, %cst_11 {dimension_numbers = #tpu.dot_dimension_numbers<[1], [0], [0], [1], [0, 0, 1, 1], [], []>} : vector<64x128xbf16>, vector<128x256xbf16>, vector<64x256xf32> -> vector<64x256xf32>
    %c0_12 = arith.constant 0 : index
    %c0_13 = arith.constant 0 : index
    %26 = vector.load %arg5[%c0_12, %c0_13] : memref<1x256xf32, #tpu.memory_space<vmem>>, vector<1x256xf32>
    %27 = vector.broadcast %26 : vector<1x256xf32> to vector<64x256xf32>
    %28 = arith.addf %25, %27 : vector<64x256xf32>
    %c0_14 = arith.constant 0 : index
    %c0_15 = arith.constant 0 : index
    %29 = vector.load %arg6[%c0_14, %c0_15] : memref<64x256xf32, #tpu.memory_space<vmem>>, vector<64x256xf32>
    tpu.vector_store %arg6[%c0_14, %c0_15], %28 {strides = array<i32>} : memref<64x256xf32, #tpu.memory_space<vmem>>, vector<64x256xf32>,
    return
  }
  func.func @transform_0(%arg0: i32) -> (i32, i32) {
    %c0_i32 = arith.constant 0 : i32
    %c0_i32_0 = arith.constant 0 : i32
    return %arg0, %c0_i32 : i32, i32
  }
  func.func @transform_1(%arg0: i32) -> (i32, i32) {
    %c0_i32 = arith.constant 0 : i32
    %c0_i32_0 = arith.constant 0 : i32
    %c0_i32_1 = arith.constant 0 : i32
    return %c0_i32, %c0_i32_0 : i32, i32
  }
  func.func @transform_2(%arg0: i32) -> (i32, i32) {
    %c0_i32 = arith.constant 0 : i32
    %c0_i32_0 = arith.constant 0 : i32
    %c0_i32_1 = arith.constant 0 : i32
    return %c0_i32, %c0_i32_0 : i32, i32
  }
  func.func @transform_3(%arg0: i32) -> (i32, i32) {
    %c0_i32 = arith.constant 0 : i32
    %c0_i32_0 = arith.constant 0 : i32
    %c0_i32_1 = arith.constant 0 : i32
    return %c0_i32, %c0_i32_0 : i32, i32
  }
  func.func @transform_4(%arg0: i32) -> (i32, i32) {
    %c0_i32 = arith.constant 0 : i32
    %c0_i32_0 = arith.constant 0 : i32
    %c0_i32_1 = arith.constant 0 : i32
    return %c0_i32, %c0_i32_0 : i32, i32
  }
  func.func @transform_5(%arg0: i32) -> (i32, i32) {
    %c0_i32 = arith.constant 0 : i32
    %c0_i32_0 = arith.constant 0 : i32
    return %arg0, %c0_i32 : i32, i32
  }
}

module attributes {stable_mosaic.version = 11 : i64} {
  func.func @_prenorm_linear_kernel(%arg0: i32, %arg1: memref<64x128xf32, #tpu.memory_space<vmem>>, %arg2: memref<1x128xf32, #tpu.memory_space<vmem>>, %arg3: memref<1x128xf32, #tpu.memory_space<vmem>>, %arg4: memref<128x256xbf16, #tpu.memory_space<vmem>>, %arg5: memref<1x256xf32, #tpu.memory_space<vmem>>, %arg6: memref<64x256xf32, #tpu.memory_space<vmem>>) attributes {dimension_semantics = [#tpu.dimension_semantics<parallel>], iteration_bounds = array<i64: 8>, scalar_prefetch = 0 : i64, scratch_operands = 0 : i64, tpu.core_type = #tpu.core_type<tc>, window_params = [{transform_indices = @transform_0, window_bounds = array<i64: 64, 128>}, {pipeline_mode = #tpu.pipeline_mode<synchronous>, transform_indices = @transform_1, window_bounds = array<i64: 1, 128>}, {pipeline_mode = #tpu.pipeline_mode<synchronous>, transform_indices = @transform_2, window_bounds = array<i64: 1, 128>}, {pipeline_mode = #tpu.pipeline_mode<synchronous>, transform_indices = @transform_3, window_bounds = array<i64: 128, 256>}, {pipeline_mode = #tpu.pipeline_mode<synchronous>, transform_indices = @transform_4, window_bounds = array<i64: 1, 256>}, {transform_indices = @transform_5, window_bounds = array<i64: 64, 256>}]} {
    %c0 = arith.constant 0 : index
    %c0_0 = arith.constant 0 : index
    %0 = vector.load %arg1[%c0, %c0_0] : memref<64x128xf32, #tpu.memory_space<vmem>>, vector<64x128xf32>
    %cst = arith.constant dense<0.000000e+00> : vector<64xf32>
    %1 = vector.multi_reduction <add>, %0, %cst [1] : vector<64x128xf32> to vector<64xf32>
    %2 = vector.shape_cast %1 : vector<64xf32> to vector<64x1xf32>
    %cst_1 = arith.constant 1.280000e+02 : f32
    %3 = vector.broadcast %cst_1 : f32 to vector<64x1xf32>
    %4 = arith.divf %2, %3 : vector<64x1xf32>
    %5 = vector.broadcast %4 : vector<64x1xf32> to vector<64x128xf32>
    %6 = arith.subf %0, %5 : vector<64x128xf32>
    %7 = arith.mulf %6, %6 : vector<64x128xf32>
    %cst_2 = arith.constant dense<0.000000e+00> : vector<64xf32>
    %8 = vector.multi_reduction <add>, %7, %cst_2 [1] : vector<64x128xf32> to vector<64xf32>
    %9 = vector.shape_cast %8 : vector<64xf32> to vector<64x1xf32>
    %cst_3 = arith.constant 1.280000e+02 : f32
    %10 = vector.broadcast %cst_3 : f32 to vector<64x1xf32>
    %11 = arith.divf %9, %10 : vector<64x1xf32>
    %cst_4 = arith.constant 9.99999974E-6 : f32
    %12 = vector.broadcast %cst_4 : f32 to vector<64x1xf32>
    %13 = arith.addf %11, %12 : vector<64x1xf32>
    %14 = math.rsqrt %13 : vector<64x1xf32>
    %15 = vector.broadcast %14 : vector<64x1xf32> to vector<64x128xf32>
    %16 = arith.mulf %6, %15 : vector<64x128xf32>
    %c0_5 = arith.constant 0 : index
    %c0_6 = arith.constant 0 : index
    %17 = vector.load %arg2[%c0_5, %c0_6] : memref<1x128xf32, #tpu.memory_space<vmem>>, vector<1x128xf32>
    %18 = vector.broadcast %17 : vector<1x128xf32> to vector<64x128xf32>
    %19 = arith.mulf %16, %18 : vector<64x128xf32>
    %c0_7 = arith.constant 0 : index
    %c0_8 = arith.constant 0 : index
    %20 = vector.load %arg3[%c0_7, %c0_8] : memref<1x128xf32, #tpu.memory_space<vmem>>, vector<1x128xf32>
    %21 = vector.broadcast %20 : vector<1x128xf32> to vector<64x128xf32>
    %22 = arith.addf %19, %21 : vector<64x128xf32>
    %23 = arith.truncf %22 : vector<64x128xf32> to vector<64x128xbf16>
    %c0_9 = arith.constant 0 : index
    %c0_10 = arith.constant 0 : index
    %24 = vector.load %arg4[%c0_9, %c0_10] : memref<128x256xbf16, #tpu.memory_space<vmem>>, vector<128x256xbf16>
    %cst_11 = arith.constant dense<0.000000e+00> : vector<64x256xf32>
    %25 = tpu.matmul %23, %24, %cst_11 {dimension_numbers = #tpu.dot_dimension_numbers<[1], [0], [0], [1], [0, 0, 1, 1], [], []>} : vector<64x128xbf16>, vector<128x256xbf16>, vector<64x256xf32> -> vector<64x256xf32>
    %c0_12 = arith.constant 0 : index
    %c0_13 = arith.constant 0 : index
    %26 = vector.load %arg5[%c0_12, %c0_13] : memref<1x256xf32, #tpu.memory_space<vmem>>, vector<1x256xf32>
    %27 = vector.broadcast %26 : vector<1x256xf32> to vector<64x256xf32>
    %28 = arith.addf %25, %27 : vector<64x256xf32>
    %c0_14 = arith.constant 0 : index
    %c0_15 = arith.constant 0 : index
    %29 = vector.load %arg6[%c0_14, %c0_15] : memref<64x256xf32, #tpu.memory_space<vmem>>, vector<64x256xf32>
    tpu.vector_store %arg6[%c0_14, %c0_15], %28 {strides = array<i32>} : memref<64x256xf32, #tpu.memory_space<vmem>>, vector<64x256xf32>,
    return
  }
  func.func @transform_0(%arg0: i32) -> (i32, i32) {
    %c0_i32 = arith.constant 0 : i32
    %c0_i32_0 = arith.constant 0 : i32
    return %arg0, %c0_i32 : i32, i32
  }
  func.func @transform_1(%arg0: i32) -> (i32, i32) {
    %c0_i32 = arith.constant 0 : i32
    %c0_i32_0 = arith.constant 0 : i32
    %c0_i32_1 = arith.constant 0 : i32
    return %c0_i32, %c0_i32_0 : i32, i32
  }
  func.func @transform_2(%arg0: i32) -> (i32, i32) {
    %c0_i32 = arith.constant 0 : i32
    %c0_i32_0 = arith.constant 0 : i32
    %c0_i32_1 = arith.constant 0 : i32
    return %c0_i32, %c0_i32_0 : i32, i32
  }
  func.func @transform_3(%arg0: i32) -> (i32, i32) {
    %c0_i32 = arith.constant 0 : i32
    %c0_i32_0 = arith.constant 0 : i32
    %c0_i32_1 = arith.constant 0 : i32
    return %c0_i32, %c0_i32_0 : i32, i32
  }
  func.func @transform_4(%arg0: i32) -> (i32, i32) {
    %c0_i32 = arith.constant 0 : i32
    %c0_i32_0 = arith.constant 0 : i32
    %c0_i32_1 = arith.constant 0 : i32
    return %c0_i32, %c0_i32_0 : i32, i32
  }
  func.func @transform_5(%arg0: i32) -> (i32, i32) {
    %c0_i32 = arith.constant 0 : i32
    %c0_i32_0 = arith.constant 0 : i32
    return %arg0, %c0_i32 : i32, i32
  }
}

</mosaic_0001>

<llo_original>
// kernel: tpu_custom_call.1
$region0: #{tpu_custom_call.1}
  #allocation0 [shape = 'u32[]', space=smem, size = 0x4, offset = 0x4, fixed_abs, tag = 'smem constant byte address 0x4 - core index']
  #allocation1 [shape = 'u32[144,128]{1,0:T(1,128)}', space=vmem, size = 0x12000, scoped, tag = 'internal scratch']
  %s0 = inlined_call_operand.hbm [shape: f32[512,128], index: 0, kind: input, shape index: {}]
  %s1 = inlined_call_operand.vmem [shape: f32[1,128], index: 1, kind: input, shape index: {}]
  %s2 = inlined_call_operand.vmem [shape: f32[1,128], index: 2, kind: input, shape index: {}]
  %s3 = inlined_call_operand.hbm [shape: bf16[128,256], index: 3, kind: input, shape index: {}]
  %s4 = inlined_call_operand.vmem [shape: f32[1,256], index: 4, kind: input, shape index: {}]
  %s5 = inlined_call_operand.hbm [shape: f32[512,256], index: 5, kind: output, shape index: {}]
  %s6 = sld [smem:[#allocation0]]
  $region61: #{tpu_custom_call.1} parent=0
    _
  %s8 = ssub.s32 1, %s6
  %s9 = scalar_select 0, %s8, %s6
  $region1: #{tpu_custom_call.1} parent=0
    #allocation2 [shape = 'u8[65536]{0}', space=vmem, size = 0x10000, scoped, tag = 'input window, operand 0']
    #allocation3 [shape = 's32[2]{0}', space=sflag, size = 0x8, scoped, tag = 'scoped memory for tpu_custom_call.1']
    #allocation4 [shape = 's32[2]{0}', space=sflag, size = 0x8, scoped, tag = 'scoped memory for tpu_custom_call.1']
    #allocation5 [shape = 'u8[65536]{0}', space=vmem, size = 0x10000, scoped, tag = 'input window, operand 3, single buffered']
    #allocation6 [shape = 's32[1]{0}', space=sflag, size = 0x4, scoped, tag = 'scoped memory for tpu_custom_call.1']
    #allocation7 [shape = 'u8[131072]{0}', space=vmem, size = 0x20000, scoped, tag = 'output window, operand 0']
    %10 = vsyncpa [#allocation3], 0
    %s11 = scalar_lea.sflag [#allocation3], 1
    %12 = vsyncpa %s11, 0
    %13 = vsyncpa [#allocation6], 0
    %14 = vsyncpa [#allocation4], 0
    %s15 = scalar_lea.sflag [#allocation4], 1
    %16 = vsyncpa %s15, 0
    loop: start=0, step=1, limit=10
    $region2: #{tpu_custom_call.1} parent=1 // loop_pre_header
      _
    $region3: #{tpu_custom_call.1} parent=1 // loop_header
      %s18 = sphi 0, %s22
      %p19 = scmp.ge.s32.totalorder %s18, 10
      %s28 = sphi 0, %s30
      %s31 = sphi 0, %s28
      %s32 = sphi 0, %s31
      %s48 = sphi 0, %s32
      %s52 = sphi 0, %s52
      %s54 = sphi 0, %s52
      %s55 = sphi 0, %s54
      %s69 = sphi 0, %s55
      %s73 = sphi 0, %s73
      %s75 = sphi 0, %s73
      %s76 = sphi 0, %s75
      %s90 = sphi 0, %s76
      %s94 = sphi 0, %s94
      %s96 = sphi 0, %s94
      %s97 = sphi 0, %s96
      %s111 = sphi 0, %s97
      %s115 = sphi 0, %s115
      %s117 = sphi 0, %s115
      %s118 = sphi 0, %s117
      %s132 = sphi 0, %s118
      %s138 = sphi 0, %s140
      %s141 = sphi 0, %s138
      %s142 = sphi 0, %s141
      %s158 = sphi 0, %s142
    $region4: #{tpu_custom_call.1} parent=1 // loop_header_branch
      %21 = sbr.rel (%p19) target = $region8
    $region5: #{tpu_custom_call.1} parent=1 // loop_body
      %s23 = ssub.s32 %s18, 1
      %s24 = ssub.s32 %s18, 2
      %s25 = sadd.s32 %s18, 1
      %s26 = ssub.s32 %s18, %s25
      %p27 = scmp.eq.s32.totalorder %s26, 0
      %s29 = sadd.s32 %s28, 1
      %s30 = scalar_select %p27, %s28, %s29
      %p33 = pneg %p27
      %p34 = scmp.eq.s32.totalorder %s18, 7
      %p35 = por %p33, %p34
      %p36 = scmp.ne.s32.totalorder %s28, %s31
      %p37 = scmp.eq.s32.totalorder %s18, 0
      %p38 = por %p36, %p37
      %p39 = scmp.ne.s32.totalorder %s28, %s31
      %p40 = scmp.eq.s32.totalorder %s23, 7
      %p41 = por %p39, %p40
      %p42 = scmp.ne.s32.totalorder %s31, %s32
      %p43 = scmp.eq.s32.totalorder %s23, 0
      %p44 = por %p42, %p43
      %p45 = scmp.ne.s32.totalorder %s31, %s32
      %p46 = scmp.eq.s32.totalorder %s24, 7
      %p47 = por %p45, %p46
      %p49 = scmp.ne.s32.totalorder %s32, %s48
      %p50 = scmp.eq.s32.totalorder %s24, 0
      %p51 = por %p49, %p50
      %s53 = sadd.s32 %s52, 1
      %p56 = scmp.eq.s32.totalorder %s18, 7
      %p57 = scmp.ne.s32.totalorder %s52, %s54
      %p58 = scmp.eq.s32.totalorder %s18, 0
      %p59 = por %p57, %p58
      %p60 = scmp.ne.s32.totalorder %s52, %s54
      %p61 = scmp.eq.s32.totalorder %s23, 7
      %p62 = por %p60, %p61
      %p63 = scmp.ne.s32.totalorder %s54, %s55
      %p64 = scmp.eq.s32.totalorder %s23, 0
      %p65 = por %p63, %p64
      %p66 = scmp.ne.s32.totalorder %s54, %s55
      %p67 = scmp.eq.s32.totalorder %s24, 7
      %p68 = por %p66, %p67
      %p70 = scmp.ne.s32.totalorder %s55, %s69
      %p71 = scmp.eq.s32.totalorder %s24, 0
      %p72 = por %p70, %p71
      %s74 = sadd.s32 %s73, 1
      %p77 = scmp.eq.s32.totalorder %s18, 7
      %p78 = scmp.ne.s32.totalorder %s73, %s75
      %p79 = scmp.eq.s32.totalorder %s18, 0
      %p80 = por %p78, %p79
      %p81 = scmp.ne.s32.totalorder %s73, %s75
      %p82 = scmp.eq.s32.totalorder %s23, 7
      %p83 = por %p81, %p82
      %p84 = scmp.ne.s32.totalorder %s75, %s76
      %p85 = scmp.eq.s32.totalorder %s23, 0
      %p86 = por %p84, %p85
      %p87 = scmp.ne.s32.totalorder %s75, %s76
      %p88 = scmp.eq.s32.totalorder %s24, 7
      %p89 = por %p87, %p88
      %p91 = scmp.ne.s32.totalorder %s76, %s90
      %p92 = scmp.eq.s32.totalorder %s24, 0
      %p93 = por %p91, %p92
      %s95 = sadd.s32 %s94, 1
      %p98 = scmp.eq.s32.totalorder %s18, 7
      %p99 = scmp.ne.s32.totalorder %s94, %s96
      %p100 = scmp.eq.s32.totalorder %s18, 0
      %p101 = por %p99, %p100
      %p102 = scmp.ne.s32.totalorder %s94, %s96
      %p103 = scmp.eq.s32.totalorder %s23, 7
      %p104 = por %p102, %p103
      %p105 = scmp.ne.s32.totalorder %s96, %s97
      %p106 = scmp.eq.s32.totalorder %s23, 0
      %p107 = por %p105, %p106
      %p108 = scmp.ne.s32.totalorder %s96, %s97
      %p109 = scmp.eq.s32.totalorder %s24, 7
      %p110 = por %p108, %p109
      %p112 = scmp.ne.s32.totalorder %s97, %s111
      %p113 = scmp.eq.s32.totalorder %s24, 0
      %p114 = por %p112, %p113
      %s116 = sadd.s32 %s115, 1
      %p119 = scmp.eq.s32.totalorder %s18, 7
      %p120 = scmp.ne.s32.totalorder %s115, %s117
      %p121 = scmp.eq.s32.totalorder %s18, 0
      %p122 = por %p120, %p121
      %p123 = scmp.ne.s32.totalorder %s115, %s117
      %p124 = scmp.eq.s32.totalorder %s23, 7
      %p125 = por %p123, %p124
      %p126 = scmp.ne.s32.totalorder %s117, %s118
      %p127 = scmp.eq.s32.totalorder %s23, 0
      %p128 = por %p126, %p127
      %p129 = scmp.ne.s32.totalorder %s117, %s118
      %p130 = scmp.eq.s32.totalorder %s24, 7
      %p131 = por %p129, %p130
      %p133 = scmp.ne.s32.totalorder %s118, %s132
      %p134 = scmp.eq.s32.totalorder %s24, 0
      %p135 = por %p133, %p134
      %s136 = ssub.s32 %s18, %s25
      %p137 = scmp.eq.s32.totalorder %s136, 0
      %s139 = sadd.s32 %s138, 1
      %s140 = scalar_select %p137, %s138, %s139
      %p143 = pneg %p137
      %p144 = scmp.eq.s32.totalorder %s18, 7
      %p145 = por %p143, %p144
      %p146 = scmp.ne.s32.totalorder %s138, %s141
      %p147 = scmp.eq.s32.totalorder %s18, 0
      %p148 = por %p146, %p147
      %p149 = scmp.ne.s32.totalorder %s138, %s141
      %p150 = scmp.eq.s32.totalorder %s23, 7
      %p151 = por %p149, %p150
      %p152 = scmp.ne.s32.totalorder %s141, %s142
      %p153 = scmp.eq.s32.totalorder %s23, 0
      %p154 = por %p152, %p153
      %p155 = scmp.ne.s32.totalorder %s141, %s142
      %p156 = scmp.eq.s32.totalorder %s24, 7
      %p157 = por %p155, %p156
      %p159 = scmp.ne.s32.totalorder %s142, %s158
      %p160 = scmp.eq.s32.totalorder %s24, 0
      %p161 = por %p159, %p160
      %p162 = scmp.le.s32.totalorder 1, %s18
      %p163 = scmp.lt.s32.totalorder %s18, 9
      %p164 = pnand %p162, %p163
      %p165 = pneg %p164
      // Predicated region
      $region9: #{tpu_custom_call.1} parent=5 // pred_check
        _
      $region10: #{tpu_custom_call.1} parent=5 // pred_check_branch
        %167 = sbr.rel (%p164) target = $region12
      $region11: #{tpu_custom_call.1} parent=5 // pred_region
        %s168 = ssub.s32 %s18, 1
        // Predicated region
        $region13: #{tpu_custom_call.1} parent=11 // pred_check
          %p169 = pneg %p65
        $region14: #{tpu_custom_call.1} parent=11 // pred_check_branch
          %171 = sbr.rel (%p169) target = $region16
        $region15: #{tpu_custom_call.1} parent=11 // pred_region
          _
        $region16: #{tpu_custom_call.1} parent=11 // pred_fallthru
          _
        // Predicated region
        $region17: #{tpu_custom_call.1} parent=11 // pred_check
          %p172 = pneg %p86
        $region18: #{tpu_custom_call.1} parent=11 // pred_check_branch
          %174 = sbr.rel (%p172) target = $region20
        $region19: #{tpu_custom_call.1} parent=11 // pred_region
          _
        $region20: #{tpu_custom_call.1} parent=11 // pred_fallthru
          _
        // Predicated region
        $region21: #{tpu_custom_call.1} parent=11 // pred_check
          %p175 = pneg %p107
        $region22: #{tpu_custom_call.1} parent=11 // pred_check_branch
          %177 = sbr.rel (%p175) target = $region24
        $region23: #{tpu_custom_call.1} parent=11 // pred_region
          %s179 = ssub.s32 2048, 2048
          %180 = vsyncadd [#allocation6], %s179
          %s181 = sshll.u32 [#allocation5], 4
          %s182 = int_to_ptr.vmem [resolvable:$true] %s181
          %187 = dma.hbm_to_vmem [thread:$0]  %s3, 2048, %s182, [#allocation6], 128, 128, 8
        $region24: #{tpu_custom_call.1} parent=11 // pred_fallthru
          _
        // Predicated region
        $region25: #{tpu_custom_call.1} parent=11 // pred_check
          %p188 = pneg %p128
        $region26: #{tpu_custom_call.1} parent=11 // pred_check_branch
          %190 = sbr.rel (%p188) target = $region28
        $region27: #{tpu_custom_call.1} parent=11 // pred_region
          _
        $region28: #{tpu_custom_call.1} parent=11 // pred_fallthru
          _
      $region12: #{tpu_custom_call.1} parent=5 // pred_fallthru
        _
      %p191 = scmp.lt.s32.totalorder %s18, 8
      // Predicated region
      $region29: #{tpu_custom_call.1} parent=5 // pred_check
        %p192 = pneg %p191
      $region30: #{tpu_custom_call.1} parent=5 // pred_check_branch
        %194 = sbr.rel (%p192) target = $region32
      $region31: #{tpu_custom_call.1} parent=5 // pred_region
        // Predicated region
        $region33: #{tpu_custom_call.1} parent=31 // pred_check
          %p195 = pneg %p38
        $region34: #{tpu_custom_call.1} parent=31 // pred_check_branch
          %197 = sbr.rel (%p195) target = $region36
        $region35: #{tpu_custom_call.1} parent=31 // pred_region
          %s198 = sand.u32 %s28, 1
          %s199 = scalar_lea.sflag [#allocation3], %s198
          %s200 = sand.u32 %s28, 1
          %s201 = smul.addr %s200, 64
          %s202 = scalar_lea.vmem [#allocation2], %s201
          %s203 = smul.u32 8, %s18
          %s205 = ssub.s32 1024, 1024
          %206 = vsyncadd %s199, %s205
          %s207 = smul.addr %s203, 128
          %s208 = scalar_lea.hbm %s0, %s207
          %s209 = sshll.u32 %s202, 4
          %s210 = int_to_ptr.vmem [resolvable:$true] %s209
          %215 = dma.hbm_to_vmem [thread:$0]  %s208, 1024, %s210, %s199, 128, 128, 8
        $region36: #{tpu_custom_call.1} parent=31 // pred_fallthru
          _
      $region32: #{tpu_custom_call.1} parent=5 // pred_fallthru
        _
      %p216 = scmp.le.s32.totalorder 1, %s18
      %p217 = scmp.lt.s32.totalorder %s18, 9
      %p218 = pnand %p216, %p217
      %p219 = pneg %p218
      // Predicated region
      $region37: #{tpu_custom_call.1} parent=5 // pred_check
        _
      $region38: #{tpu_custom_call.1} parent=5 // pred_check_branch
        %221 = sbr.rel (%p218) target = $region40
      $region39: #{tpu_custom_call.1} parent=5 // pred_region
        %s222 = ssub.s32 %s18, 1
        %s223 = sand.u32 %s31, 1
        %s224 = scalar_lea.sflag [#allocation3], %s223
        %s225 = sand.u32 %s31, 1
        %s226 = smul.addr %s225, 64
        %s227 = scalar_lea.vmem [#allocation2], %s226
        // Predicated region
        $region41: #{tpu_custom_call.1} parent=39 // pred_check
          %p228 = pneg %p44
        $region42: #{tpu_custom_call.1} parent=39 // pred_check_branch
          %230 = sbr.rel (%p228) target = $region44
        $region43: #{tpu_custom_call.1} parent=39 // pred_region
          %231 = dma.done %s224, 1024
        $region44: #{tpu_custom_call.1} parent=39 // pred_fallthru
          _
        // Predicated region
        $region45: #{tpu_custom_call.1} parent=39 // pred_check
          %p232 = pneg %p107
        $region46: #{tpu_custom_call.1} parent=39 // pred_check_branch
          %234 = sbr.rel (%p232) target = $region48
        $region47: #{tpu_custom_call.1} parent=39 // pred_region
          %235 = dma.done [#allocation6], 2048
        $region48: #{tpu_custom_call.1} parent=39 // pred_fallthru
          _
        %s236 = sand.u32 %s31, 1
        %s237 = scalar_lea.sflag [#allocation3], %s236
        %s238 = sand.u32 %s31, 1
        %s239 = smul.addr %s238, 64
        %s240 = scalar_lea.vmem [#allocation2], %s239
        %p241 = pneg %p44
        %p242 = pneg %p41
        %p243 = pneg %p65
        %p244 = pneg %p62
        %p245 = pneg %p86
        %p246 = pneg %p83
        %p247 = pneg %p107
        %p248 = pneg %p104
        %p249 = pneg %p128
        %p250 = pneg %p125
        %p251 = pneg %p154
        %p252 = pneg %p151
        %s253 = sand.u32 %s141, 1
        %s254 = scalar_lea.sflag [#allocation4], %s253
        %s255 = sand.u32 %s141, 1
        %s256 = smul.addr %s255, 128
        %s257 = scalar_lea.vmem [#allocation7], %s256
        %s258 = smul.u32 8, %s23
        %s259 = smul.u32 8, %s23
        %v261 = vld [vmem:[%s227] sm:$0xff]
        %v262 = vld [vmem:[%s227 + $0x8] sm:$0xff]
        %v263 = vld [vmem:[%s227 + $0x10] sm:$0xff]
        %v264 = vld [vmem:[%s227 + $0x18] sm:$0xff]
        %v265 = vld [vmem:[%s227 + $0x20] sm:$0xff]
        %v266 = vld [vmem:[%s227 + $0x28] sm:$0xff]
        %v267 = vld [vmem:[%s227 + $0x30] sm:$0xff]
        %v268 = vld [vmem:[%s227 + $0x38] sm:$0xff]
        %269 = vadd.xlane.f32.xlu0 %v261
        %v270 = vpop.xlane.xlu0 %269
        %271 = vadd.xlane.f32.xlu0 %v262
        %v272 = vpop.xlane.xlu0 %271
        %273 = vadd.xlane.f32.xlu0 %v263
        %v274 = vpop.xlane.xlu0 %273
        %275 = vadd.xlane.f32.xlu0 %v264
        %v276 = vpop.xlane.xlu0 %275
        %277 = vadd.xlane.f32.xlu0 %v265
        %v278 = vpop.xlane.xlu0 %277
        %279 = vadd.xlane.f32.xlu0 %v266
        %v280 = vpop.xlane.xlu0 %279
        %281 = vadd.xlane.f32.xlu0 %v267
        %v282 = vpop.xlane.xlu0 %281
        %283 = vadd.xlane.f32.xlu0 %v268
        %v284 = vpop.xlane.xlu0 %283
        %v285 = vrcp.pop 128.0
        %v286 = vmul.f32 %v270, %v285
        %v287 = vmul.f32 %v272, %v285
        %v288 = vmul.f32 %v274, %v285
        %v289 = vmul.f32 %v276, %v285
        %v290 = vmul.f32 %v278, %v285
        %v291 = vmul.f32 %v280, %v285
        %v292 = vmul.f32 %v282, %v285
        %v293 = vmul.f32 %v284, %v285
        %v294 = vsub.f32 %v261, %v286
        %v295 = vsub.f32 %v262, %v287
        %v296 = vsub.f32 %v263, %v288
        %v297 = vsub.f32 %v264, %v289
        %v298 = vsub.f32 %v265, %v290
        %v299 = vsub.f32 %v266, %v291
        %v300 = vsub.f32 %v267, %v292
        %v301 = vsub.f32 %v268, %v293
        %v302 = vmul.f32 %v294, %v294
        %v303 = vmul.f32 %v295, %v295
        %v304 = vmul.f32 %v296, %v296
        %v305 = vmul.f32 %v297, %v297
        %v306 = vmul.f32 %v298, %v298
        %v307 = vmul.f32 %v299, %v299
        %v308 = vmul.f32 %v300, %v300
        %v309 = vmul.f32 %v301, %v301
        %310 = vadd.xlane.f32.xlu0 %v302
        %v311 = vpop.xlane.xlu0 %310
        %312 = vadd.xlane.f32.xlu0 %v303
        %v313 = vpop.xlane.xlu0 %312
        %314 = vadd.xlane.f32.xlu0 %v304
        %v315 = vpop.xlane.xlu0 %314
        %316 = vadd.xlane.f32.xlu0 %v305
        %v317 = vpop.xlane.xlu0 %316
        %318 = vadd.xlane.f32.xlu0 %v306
        %v319 = vpop.xlane.xlu0 %318
        %320 = vadd.xlane.f32.xlu0 %v307
        %v321 = vpop.xlane.xlu0 %320
        %322 = vadd.xlane.f32.xlu0 %v308
        %v323 = vpop.xlane.xlu0 %322
        %324 = vadd.xlane.f32.xlu0 %v309
        %v325 = vpop.xlane.xlu0 %324
        %v326 = vmul.f32 %v311, %v285
        %v327 = vmul.f32 %v313, %v285
        %v328 = vmul.f32 %v315, %v285
        %v329 = vmul.f32 %v317, %v285
        %v330 = vmul.f32 %v319, %v285
        %v331 = vmul.f32 %v321, %v285
        %v332 = vmul.f32 %v323, %v285
        %v333 = vmul.f32 %v325, %v285
        %v334 = vadd.f32 %v326, 1e-05
        %v335 = vadd.f32 %v327, 1e-05
        %v336 = vadd.f32 %v328, 1e-05
        %v337 = vadd.f32 %v329, 1e-05
        %v338 = vadd.f32 %v330, 1e-05
        %v339 = vadd.f32 %v331, 1e-05
        %v340 = vadd.f32 %v332, 1e-05
        %v341 = vadd.f32 %v333, 1e-05
        %v342 = vrsqrt.pop %v334
        %v343 = vrsqrt.pop %v335
        %v344 = vrsqrt.pop %v336
        %v345 = vrsqrt.pop %v337
        %v346 = vrsqrt.pop %v338
        %v347 = vrsqrt.pop %v339
        %v348 = vrsqrt.pop %v340
        %v349 = vrsqrt.pop %v341
        %v350 = vmul.f32 %v294, %v342
        %v351 = vmul.f32 %v295, %v343
        %v352 = vmul.f32 %v296, %v344
        %v353 = vmul.f32 %v297, %v345
        %v354 = vmul.f32 %v298, %v346
        %v355 = vmul.f32 %v299, %v347
        %v356 = vmul.f32 %v300, %v348
        %v357 = vmul.f32 %v301, %v349
        %v358 = vld [vmem:[%s1] sm:$0x1]
        %v360 = vlaneseq
        %v361 = vshrl.u32 %v360, 7
        %v362 = vsub.s32 0, %v361
        %v363 = vrot.slane %v358, %v362
        %v365 = vmul.f32 %v350, %v363
        %v366 = vmul.f32 %v351, %v363
        %v367 = vmul.f32 %v352, %v363
        %v368 = vmul.f32 %v353, %v363
        %v369 = vmul.f32 %v354, %v363
        %v370 = vmul.f32 %v355, %v363
        %v371 = vmul.f32 %v356, %v363
        %v372 = vmul.f32 %v357, %v363
        %v373 = vld [vmem:[%s2] sm:$0x1]
        %v375 = vlaneseq
        %v376 = vshrl.u32 %v375, 7
        %v377 = vsub.s32 0, %v376
        %v378 = vrot.slane %v373, %v377
        %v380 = vadd.f32 %v365, %v378
        %v381 = vadd.f32 %v366, %v378
        %v382 = vadd.f32 %v367, %v378
        %v383 = vadd.f32 %v368, %v378
        %v384 = vadd.f32 %v369, %v378
        %v385 = vadd.f32 %v370, %v378
        %v386 = vadd.f32 %v371, %v378
        %v387 = vadd.f32 %v372, %v378
        %v388 = vpack.c.bf16 %v381, %v380
        %v389 = vpack.c.bf16 %v383, %v382
        %v390 = vpack.c.bf16 %v385, %v384
        %v391 = vpack.c.bf16 %v387, %v386
        %v392 = vld [vmem:[#allocation5] sm:$0xff]
        %v393 = vld [vmem:[#allocation5 + $0x8] sm:$0xff]
        %v394 = vld [vmem:[#allocation5 + $0x10] sm:$0xff]
        %v395 = vld [vmem:[#allocation5 + $0x18] sm:$0xff]
        %v396 = vld [vmem:[#allocation5 + $0x20] sm:$0xff]
        %v397 = vld [vmem:[#allocation5 + $0x28] sm:$0xff]
        %v398 = vld [vmem:[#allocation5 + $0x30] sm:$0xff]
        %v399 = vld [vmem:[#allocation5 + $0x38] sm:$0xff]
        %v400 = vld [vmem:[#allocation5 + $0x40] sm:$0xff]
        %v401 = vld [vmem:[#allocation5 + $0x48] sm:$0xff]
        %v402 = vld [vmem:[#allocation5 + $0x50] sm:$0xff]
        %v403 = vld [vmem:[#allocation5 + $0x58] sm:$0xff]
        %v404 = vld [vmem:[#allocation5 + $0x60] sm:$0xff]
        %v405 = vld [vmem:[#allocation5 + $0x68] sm:$0xff]
        %v406 = vld [vmem:[#allocation5 + $0x70] sm:$0xff]
        %v407 = vld [vmem:[#allocation5 + $0x78] sm:$0xff]
        %v408 = vld [vmem:[%s4] sm:$0x3]
        %v410 = vlaneseq
        %v411 = vshrl.u32 %v410, 7
        %v412 = vsub.s32 0, %v411
        %v413 = vrot.slane %v408, %v412
        %v414 = vlaneseq
        %v415 = vshrl.u32 %v414, 7
        %v416 = vsub.s32 1, %v415
        %v417 = vrot.slane %v408, %v416
        %v436 = vunpack.c.l.b16 %v392
        %v437 = vunpack.c.h.b16 %v392
        %v438 = vunpack.c.l.b16 %v393
        %v439 = vunpack.c.h.b16 %v393
        %v440 = vunpack.c.l.b16 %v394
        %v441 = vunpack.c.h.b16 %v394
        %v442 = vunpack.c.l.b16 %v395
        %v443 = vunpack.c.h.b16 %v395
        %v444 = vunpack.c.l.b16 %v396
        %v445 = vunpack.c.h.b16 %v396
        %v446 = vunpack.c.l.b16 %v397
        %v447 = vunpack.c.h.b16 %v397
        %v448 = vunpack.c.l.b16 %v398
        %v449 = vunpack.c.h.b16 %v398
        %v450 = vunpack.c.l.b16 %v399
        %v451 = vunpack.c.h.b16 %v399
        %v452 = vunpack.c.l.b16 %v400
        %v453 = vunpack.c.h.b16 %v400
        %v454 = vunpack.c.l.b16 %v401
        %v455 = vunpack.c.h.b16 %v401
        %v456 = vunpack.c.l.b16 %v402
        %v457 = vunpack.c.h.b16 %v402
        %v458 = vunpack.c.l.b16 %v403
        %v459 = vunpack.c.h.b16 %v403
        %v460 = vunpack.c.l.b16 %v404
        %v461 = vunpack.c.h.b16 %v404
        %v462 = vunpack.c.l.b16 %v405
        %v463 = vunpack.c.h.b16 %v405
        %v464 = vunpack.c.l.b16 %v406
        %v465 = vunpack.c.h.b16 %v406
        %v466 = vunpack.c.l.b16 %v407
        %v467 = vunpack.c.h.b16 %v407
        %v468 = vpack.c.b16 %v438, %v436
        %v469 = vpack.c.b16 %v439, %v437
        %v470 = vpack.c.b16 %v442, %v440
        %v471 = vpack.c.b16 %v443, %v441
        %v472 = vpack.c.b16 %v446, %v444
        %v473 = vpack.c.b16 %v447, %v445
        %v474 = vpack.c.b16 %v450, %v448
        %v475 = vpack.c.b16 %v451, %v449
        %v476 = vpack.c.b16 %v454, %v452
        %v477 = vpack.c.b16 %v455, %v453
        %v478 = vpack.c.b16 %v458, %v456
        %v479 = vpack.c.b16 %v459, %v457
        %v480 = vpack.c.b16 %v462, %v460
        %v481 = vpack.c.b16 %v463, %v461
        %v482 = vpack.c.b16 %v466, %v464
        %v483 = vpack.c.b16 %v467, %v465
        %500 = vmatprep.subr.bf16.mxu0 %v469
        %501 = vmatpush1.bf16.msra.mxu0 %v468
        %502 = vmatprep.subr.bf16.mxu0 %v471
        %503 = vmatpush1.bf16.msra.mxu0 %v470
        %504 = vmatprep.subr.bf16.mxu0 %v473
        %505 = vmatpush1.bf16.msra.mxu0 %v472
        %506 = vmatprep.subr.bf16.mxu0 %v475
        %507 = vmatpush1.bf16.msra.mxu0 %v474
        %508 = vmatprep.subr.bf16.mxu0 %v477
        %509 = vmatpush1.bf16.msra.mxu0 %v476
        %510 = vmatprep.subr.bf16.mxu0 %v479
        %511 = vmatpush1.bf16.msra.mxu0 %v478
        %512 = vmatprep.subr.bf16.mxu0 %v481
        %513 = vmatpush1.bf16.msra.mxu0 %v480
        %514 = vmatprep.subr.bf16.mxu0 %v483
        %515 = vmatpush1.bf16.msra.mxu0 %v482
        %516 = vmatprep.subr.bf16.mxu0 0
        %517 = vmatpush1.bf16.msra.mxu0 0
        %518 = vmatprep.subr.bf16.mxu0 0
        %519 = vmatpush1.bf16.msra.mxu0 0
        %520 = vmatprep.subr.bf16.mxu0 0
        %521 = vmatpush1.bf16.msra.mxu0 0
        %522 = vmatprep.subr.bf16.mxu0 0
        %523 = vmatpush1.bf16.msra.mxu0 0
        %524 = vmatprep.subr.bf16.mxu0 0
        %525 = vmatpush1.bf16.msra.mxu0 0
        %526 = vmatprep.subr.bf16.mxu0 0
        %527 = vmatpush1.bf16.msra.mxu0 0
        %528 = vmatprep.subr.bf16.mxu0 0
        %529 = vmatpush1.bf16.msra.mxu0 0
        %530 = vmatprep.subr.bf16.mxu0 0
        %531 = vmatpush1.bf16.msra.mxu0 0
        %532 = vmatprep.mubr.bf16.mxu0 0
        %533 = vmatmul.mubr.bf16.gmra.mrb[0].mxu0 %v388
        %v534 = vpop.f32.mrb[0].mxu0
        %v535 = vadd.f32 %v413, %v534
        %v536 = vpop.f32.mrb[0].mxu0
        %v537 = vadd.f32 %v417, %v536
        %v538 = vpop.f32.mrb[0].mxu0
        %v539 = vadd.f32 %v413, %v538
        %v540 = vpop.f32.mrb[0].mxu0
        %v541 = vadd.f32 %v417, %v540
        %542 = vmatprep.mubr.bf16.mxu0 0
        %543 = vmatmul.mubr.bf16.gmra.mrb[0].mxu0 %v389
        %v544 = vpop.f32.mrb[0].mxu0
        %v545 = vadd.f32 %v413, %v544
        %v546 = vpop.f32.mrb[0].mxu0
        %v547 = vadd.f32 %v417, %v546
        %v548 = vpop.f32.mrb[0].mxu0
        %v549 = vadd.f32 %v413, %v548
        %v550 = vpop.f32.mrb[0].mxu0
        %v551 = vadd.f32 %v417, %v550
        %552 = vmatprep.mubr.bf16.mxu0 0
        %553 = vmatmul.mubr.bf16.gmra.mrb[0].mxu0 %v390
        %v554 = vpop.f32.mrb[0].mxu0
        %v555 = vadd.f32 %v413, %v554
        %v556 = vpop.f32.mrb[0].mxu0
        %v557 = vadd.f32 %v417, %v556
        %v558 = vpop.f32.mrb[0].mxu0
        %v559 = vadd.f32 %v413, %v558
        %v560 = vpop.f32.mrb[0].mxu0
        %v561 = vadd.f32 %v417, %v560
        %562 = vmatprep.mubr.bf16.mxu0 0
        %563 = vmatmul.mubr.bf16.gmra.mrb[0].mxu0 %v391
        %v564 = vpop.f32.mrb[0].mxu0
        %v565 = vadd.f32 %v413, %v564
        %v566 = vpop.f32.mrb[0].mxu0
        %v567 = vadd.f32 %v417, %v566
        %v568 = vpop.f32.mrb[0].mxu0
        %v569 = vadd.f32 %v413, %v568
        %v570 = vpop.f32.mrb[0].mxu0
        %v571 = vadd.f32 %v417, %v570
        %572 = vdwg.mxu0
        %573 = vst [vmem:[%s257] sm:$0xff] %v535
        %574 = vst [vmem:[%s257 + $0x8] sm:$0xff] %v537
        %575 = vst [vmem:[%s257 + $0x10] sm:$0xff] %v539
        %576 = vst [vmem:[%s257 + $0x18] sm:$0xff] %v541
        %577 = vst [vmem:[%s257 + $0x20] sm:$0xff] %v545
        %578 = vst [vmem:[%s257 + $0x28] sm:$0xff] %v547
        %579 = vst [vmem:[%s257 + $0x30] sm:$0xff] %v549
        %580 = vst [vmem:[%s257 + $0x38] sm:$0xff] %v551
        %581 = vst [vmem:[%s257 + $0x40] sm:$0xff] %v555
        %582 = vst [vmem:[%s257 + $0x48] sm:$0xff] %v557
        %583 = vst [vmem:[%s257 + $0x50] sm:$0xff] %v559
        %584 = vst [vmem:[%s257 + $0x58] sm:$0xff] %v561
        %585 = vst [vmem:[%s257 + $0x60] sm:$0xff] %v565
        %586 = vst [vmem:[%s257 + $0x68] sm:$0xff] %v567
        %587 = vst [vmem:[%s257 + $0x70] sm:$0xff] %v569
        %588 = vst [vmem:[%s257 + $0x78] sm:$0xff] %v571
        %s589 = sand.u32 %s141, 1
        %s590 = scalar_lea.sflag [#allocation4], %s589
        %s591 = sand.u32 %s141, 1
        %s592 = smul.addr %s591, 128
        %s593 = scalar_lea.vmem [#allocation7], %s592
        // Predicated region
        $region49: #{tpu_custom_call.1} parent=39 // pred_check
          %p594 = pneg %p151
        $region50: #{tpu_custom_call.1} parent=39 // pred_check_branch
          %596 = sbr.rel (%p594) target = $region52
        $region51: #{tpu_custom_call.1} parent=39 // pred_region
          %s597 = smul.u32 8, %s23
          %s599 = ssub.s32 2048, 2048
          %600 = vsyncadd %s590, %s599
          %s601 = smul.addr %s597, 2
          %s602 = smul.addr %s601, 128
          %s603 = scalar_lea.hbm %s5, %s602
          %s604 = sshll.u32 %s593, 4
          %s605 = int_to_ptr.vmem [resolvable:$true] %s604
          %610 = dma.vmem_to_hbm [thread:$0]  %s605, 2048, %s603, %s590, 256, 256, 16
        $region52: #{tpu_custom_call.1} parent=39 // pred_fallthru
          _
      $region40: #{tpu_custom_call.1} parent=5 // pred_fallthru
        _
      %p611 = scmp.le.s32.totalorder 2, %s18
      // Predicated region
      $region53: #{tpu_custom_call.1} parent=5 // pred_check
        %p612 = pneg %p611
      $region54: #{tpu_custom_call.1} parent=5 // pred_check_branch
        %614 = sbr.rel (%p612) target = $region56
      $region55: #{tpu_custom_call.1} parent=5 // pred_region
        %s615 = ssub.s32 %s18, 2
        // Predicated region
        $region57: #{tpu_custom_call.1} parent=55 // pred_check
          %p616 = pneg %p157
        $region58: #{tpu_custom_call.1} parent=55 // pred_check_branch
          %618 = sbr.rel (%p616) target = $region60
        $region59: #{tpu_custom_call.1} parent=55 // pred_region
          %s619 = sand.u32 %s142, 1
          %s620 = scalar_lea.sflag [#allocation4], %s619
          %s621 = sand.u32 %s142, 1
          %s622 = smul.addr %s621, 128
          %s623 = scalar_lea.vmem [#allocation7], %s622
          %624 = dma.done %s620, 2048
        $region60: #{tpu_custom_call.1} parent=55 // pred_fallthru
          _
      $region56: #{tpu_custom_call.1} parent=5 // pred_fallthru
        _
    $region6: #{tpu_custom_call.1} parent=1 // loop_footer
      %s22 = sadd.s32 1, %s18
    $region7: #{tpu_custom_call.1} parent=1 // loop_footer_branch
      %17 = sbr.rel target = $region3
    $region8: #{tpu_custom_call.1} parent=1 // loop_exit
      _
    %625 = vsyncpa [#allocation3], 1
    %s626 = scalar_lea.sflag [#allocation3], 1
    %627 = vsyncpa %s626, 1
    %628 = vsyncpa [#allocation6], 1
    %629 = vsyncpa [#allocation4], 1
    %s630 = scalar_lea.sflag [#allocation4], 1
    %631 = vsyncpa %s630, 1

// kernel: tpu_custom_call.1
$region0: #{tpu_custom_call.1}
  #allocation0 [shape = 'u32[]', space=smem, size = 0x4, offset = 0x4, fixed_abs, tag = 'smem constant byte address 0x4 - core index']
  #allocation1 [shape = 'u32[144,128]{1,0:T(1,128)}', space=vmem, size = 0x12000, scoped, tag = 'internal scratch']
  %s0 = inlined_call_operand.hbm [shape: f32[512,128], index: 0, kind: input, shape index: {}]
  %s1 = inlined_call_operand.vmem [shape: f32[1,128], index: 1, kind: input, shape index: {}]
  %s2 = inlined_call_operand.vmem [shape: f32[1,128], index: 2, kind: input, shape index: {}]
  %s3 = inlined_call_operand.hbm [shape: bf16[128,256], index: 3, kind: input, shape index: {}]
  %s4 = inlined_call_operand.vmem [shape: f32[1,256], index: 4, kind: input, shape index: {}]
  %s5 = inlined_call_operand.hbm [shape: f32[512,256], index: 5, kind: output, shape index: {}]
  %s6 = sld [smem:[#allocation0]]
  $region61: #{tpu_custom_call.1} parent=0
    _
  %s8 = ssub.s32 1, %s6
  %s9 = scalar_select 0, %s8, %s6
  $region1: #{tpu_custom_call.1} parent=0
    #allocation2 [shape = 'u8[65536]{0}', space=vmem, size = 0x10000, scoped, tag = 'input window, operand 0']
    #allocation3 [shape = 's32[2]{0}', space=sflag, size = 0x8, scoped, tag = 'scoped memory for tpu_custom_call.1']
    #allocation4 [shape = 's32[2]{0}', space=sflag, size = 0x8, scoped, tag = 'scoped memory for tpu_custom_call.1']
    #allocation5 [shape = 'u8[65536]{0}', space=vmem, size = 0x10000, scoped, tag = 'input window, operand 3, single buffered']
    #allocation6 [shape = 's32[1]{0}', space=sflag, size = 0x4, scoped, tag = 'scoped memory for tpu_custom_call.1']
    #allocation7 [shape = 'u8[131072]{0}', space=vmem, size = 0x20000, scoped, tag = 'output window, operand 0']
    %10 = vsyncpa [#allocation3], 0
    %s11 = scalar_lea.sflag [#allocation3], 1
    %12 = vsyncpa %s11, 0
    %13 = vsyncpa [#allocation6], 0
    %14 = vsyncpa [#allocation4], 0
    %s15 = scalar_lea.sflag [#allocation4], 1
    %16 = vsyncpa %s15, 0
    loop: start=0, step=1, limit=10
    $region2: #{tpu_custom_call.1} parent=1 // loop_pre_header
      _
    $region3: #{tpu_custom_call.1} parent=1 // loop_header
      %s18 = sphi 0, %s22
      %p19 = scmp.ge.s32.totalorder %s18, 10
      %s28 = sphi 0, %s30
      %s31 = sphi 0, %s28
      %s32 = sphi 0, %s31
      %s48 = sphi 0, %s32
      %s52 = sphi 0, %s52
      %s54 = sphi 0, %s52
      %s55 = sphi 0, %s54
      %s69 = sphi 0, %s55
      %s73 = sphi 0, %s73
      %s75 = sphi 0, %s73
      %s76 = sphi 0, %s75
      %s90 = sphi 0, %s76
      %s94 = sphi 0, %s94
      %s96 = sphi 0, %s94
      %s97 = sphi 0, %s96
      %s111 = sphi 0, %s97
      %s115 = sphi 0, %s115
      %s117 = sphi 0, %s115
      %s118 = sphi 0, %s117
      %s132 = sphi 0, %s118
      %s138 = sphi 0, %s140
      %s141 = sphi 0, %s138
      %s142 = sphi 0, %s141
      %s158 = sphi 0, %s142
    $region4: #{tpu_custom_call.1} parent=1 // loop_header_branch
      %21 = sbr.rel (%p19) target = $region8
    $region5: #{tpu_custom_call.1} parent=1 // loop_body
      %s23 = ssub.s32 %s18, 1
      %s24 = ssub.s32 %s18, 2
      %s25 = sadd.s32 %s18, 1
      %s26 = ssub.s32 %s18, %s25
      %p27 = scmp.eq.s32.totalorder %s26, 0
      %s29 = sadd.s32 %s28, 1
      %s30 = scalar_select %p27, %s28, %s29
      %p33 = pneg %p27
      %p34 = scmp.eq.s32.totalorder %s18, 7
      %p35 = por %p33, %p34
      %p36 = scmp.ne.s32.totalorder %s28, %s31
      %p37 = scmp.eq.s32.totalorder %s18, 0
      %p38 = por %p36, %p37
      %p39 = scmp.ne.s32.totalorder %s28, %s31
      %p40 = scmp.eq.s32.totalorder %s23, 7
      %p41 = por %p39, %p40
      %p42 = scmp.ne.s32.totalorder %s31, %s32
      %p43 = scmp.eq.s32.totalorder %s23, 0
      %p44 = por %p42, %p43
      %p45 = scmp.ne.s32.totalorder %s31, %s32
      %p46 = scmp.eq.s32.totalorder %s24, 7
      %p47 = por %p45, %p46
      %p49 = scmp.ne.s32.totalorder %s32, %s48
      %p50 = scmp.eq.s32.totalorder %s24, 0
      %p51 = por %p49, %p50
      %s53 = sadd.s32 %s52, 1
      %p56 = scmp.eq.s32.totalorder %s18, 7
      %p57 = scmp.ne.s32.totalorder %s52, %s54
      %p58 = scmp.eq.s32.totalorder %s18, 0
      %p59 = por %p57, %p58
      %p60 = scmp.ne.s32.totalorder %s52, %s54
      %p61 = scmp.eq.s32.totalorder %s23, 7
      %p62 = por %p60, %p61
      %p63 = scmp.ne.s32.totalorder %s54, %s55
      %p64 = scmp.eq.s32.totalorder %s23, 0
      %p65 = por %p63, %p64
      %p66 = scmp.ne.s32.totalorder %s54, %s55
      %p67 = scmp.eq.s32.totalorder %s24, 7
      %p68 = por %p66, %p67
      %p70 = scmp.ne.s32.totalorder %s55, %s69
      %p71 = scmp.eq.s32.totalorder %s24, 0
      %p72 = por %p70, %p71
      %s74 = sadd.s32 %s73, 1
      %p77 = scmp.eq.s32.totalorder %s18, 7
      %p78 = scmp.ne.s32.totalorder %s73, %s75
      %p79 = scmp.eq.s32.totalorder %s18, 0
      %p80 = por %p78, %p79
      %p81 = scmp.ne.s32.totalorder %s73, %s75
      %p82 = scmp.eq.s32.totalorder %s23, 7
      %p83 = por %p81, %p82
      %p84 = scmp.ne.s32.totalorder %s75, %s76
      %p85 = scmp.eq.s32.totalorder %s23, 0
      %p86 = por %p84, %p85
      %p87 = scmp.ne.s32.totalorder %s75, %s76
      %p88 = scmp.eq.s32.totalorder %s24, 7
      %p89 = por %p87, %p88
      %p91 = scmp.ne.s32.totalorder %s76, %s90
      %p92 = scmp.eq.s32.totalorder %s24, 0
      %p93 = por %p91, %p92
      %s95 = sadd.s32 %s94, 1
      %p98 = scmp.eq.s32.totalorder %s18, 7
      %p99 = scmp.ne.s32.totalorder %s94, %s96
      %p100 = scmp.eq.s32.totalorder %s18, 0
      %p101 = por %p99, %p100
      %p102 = scmp.ne.s32.totalorder %s94, %s96
      %p103 = scmp.eq.s32.totalorder %s23, 7
      %p104 = por %p102, %p103
      %p105 = scmp.ne.s32.totalorder %s96, %s97
      %p106 = scmp.eq.s32.totalorder %s23, 0
      %p107 = por %p105, %p106
      %p108 = scmp.ne.s32.totalorder %s96, %s97
      %p109 = scmp.eq.s32.totalorder %s24, 7
      %p110 = por %p108, %p109
      %p112 = scmp.ne.s32.totalorder %s97, %s111
      %p113 = scmp.eq.s32.totalorder %s24, 0
      %p114 = por %p112, %p113
      %s116 = sadd.s32 %s115, 1
      %p119 = scmp.eq.s32.totalorder %s18, 7
      %p120 = scmp.ne.s32.totalorder %s115, %s117
      %p121 = scmp.eq.s32.totalorder %s18, 0
      %p122 = por %p120, %p121
      %p123 = scmp.ne.s32.totalorder %s115, %s117
      %p124 = scmp.eq.s32.totalorder %s23, 7
      %p125 = por %p123, %p124
      %p126 = scmp.ne.s32.totalorder %s117, %s118
      %p127 = scmp.eq.s32.totalorder %s23, 0
      %p128 = por %p126, %p127
      %p129 = scmp.ne.s32.totalorder %s117, %s118
      %p130 = scmp.eq.s32.totalorder %s24, 7
      %p131 = por %p129, %p130
      %p133 = scmp.ne.s32.totalorder %s118, %s132
      %p134 = scmp.eq.s32.totalorder %s24, 0
      %p135 = por %p133, %p134
      %s136 = ssub.s32 %s18, %s25
      %p137 = scmp.eq.s32.totalorder %s136, 0
      %s139 = sadd.s32 %s138, 1
      %s140 = scalar_select %p137, %s138, %s139
      %p143 = pneg %p137
      %p144 = scmp.eq.s32.totalorder %s18, 7
      %p145 = por %p143, %p144
      %p146 = scmp.ne.s32.totalorder %s138, %s141
      %p147 = scmp.eq.s32.totalorder %s18, 0
      %p148 = por %p146, %p147
      %p149 = scmp.ne.s32.totalorder %s138, %s141
      %p150 = scmp.eq.s32.totalorder %s23, 7
      %p151 = por %p149, %p150
      %p152 = scmp.ne.s32.totalorder %s141, %s142
      %p153 = scmp.eq.s32.totalorder %s23, 0
      %p154 = por %p152, %p153
      %p155 = scmp.ne.s32.totalorder %s141, %s142
      %p156 = scmp.eq.s32.totalorder %s24, 7
      %p157 = por %p155, %p156
      %p159 = scmp.ne.s32.totalorder %s142, %s158
      %p160 = scmp.eq.s32.totalorder %s24, 0
      %p161 = por %p159, %p160
      %p162 = scmp.le.s32.totalorder 1, %s18
      %p163 = scmp.lt.s32.totalorder %s18, 9
      %p164 = pnand %p162, %p163
      %p165 = pneg %p164
      // Predicated region
      $region9: #{tpu_custom_call.1} parent=5 // pred_check
        _
      $region10: #{tpu_custom_call.1} parent=5 // pred_check_branch
        %167 = sbr.rel (%p164) target = $region12
      $region11: #{tpu_custom_call.1} parent=5 // pred_region
        %s168 = ssub.s32 %s18, 1
        // Predicated region
        $region13: #{tpu_custom_call.1} parent=11 // pred_check
          %p169 = pneg %p65
        $region14: #{tpu_custom_call.1} parent=11 // pred_check_branch
          %171 = sbr.rel (%p169) target = $region16
        $region15: #{tpu_custom_call.1} parent=11 // pred_region
          _
        $region16: #{tpu_custom_call.1} parent=11 // pred_fallthru
          _
        // Predicated region
        $region17: #{tpu_custom_call.1} parent=11 // pred_check
          %p172 = pneg %p86
        $region18: #{tpu_custom_call.1} parent=11 // pred_check_branch
          %174 = sbr.rel (%p172) target = $region20
        $region19: #{tpu_custom_call.1} parent=11 // pred_region
          _
        $region20: #{tpu_custom_call.1} parent=11 // pred_fallthru
          _
        // Predicated region
        $region21: #{tpu_custom_call.1} parent=11 // pred_check
          %p175 = pneg %p107
        $region22: #{tpu_custom_call.1} parent=11 // pred_check_branch
          %177 = sbr.rel (%p175) target = $region24
        $region23: #{tpu_custom_call.1} parent=11 // pred_region
          %s179 = ssub.s32 2048, 2048
          %180 = vsyncadd [#allocation6], %s179
          %s181 = sshll.u32 [#allocation5], 4
          %s182 = int_to_ptr.vmem [resolvable:$true] %s181
          %187 = dma.hbm_to_vmem [thread:$0]  %s3, 2048, %s182, [#allocation6], 128, 128, 8
        $region24: #{tpu_custom_call.1} parent=11 // pred_fallthru
          _
        // Predicated region
        $region25: #{tpu_custom_call.1} parent=11 // pred_check
          %p188 = pneg %p128
        $region26: #{tpu_custom_call.1} parent=11 // pred_check_branch
          %190 = sbr.rel (%p188) target = $region28
        $region27: #{tpu_custom_call.1} parent=11 // pred_region
          _
        $region28: #{tpu_custom_call.1} parent=11 // pred_fallthru
          _
      $region12: #{tpu_custom_call.1} parent=5 // pred_fallthru
        _
      %p191 = scmp.lt.s32.totalorder %s18, 8
      // Predicated region
      $region29: #{tpu_custom_call.1} parent=5 // pred_check
        %p192 = pneg %p191
      $region30: #{tpu_custom_call.1} parent=5 // pred_check_branch
        %194 = sbr.rel (%p192) target = $region32
      $region31: #{tpu_custom_call.1} parent=5 // pred_region
        // Predicated region
        $region33: #{tpu_custom_call.1} parent=31 // pred_check
          %p195 = pneg %p38
        $region34: #{tpu_custom_call.1} parent=31 // pred_check_branch
          %197 = sbr.rel (%p195) target = $region36
        $region35: #{tpu_custom_call.1} parent=31 // pred_region
          %s198 = sand.u32 %s28, 1
          %s199 = scalar_lea.sflag [#allocation3], %s198
          %s200 = sand.u32 %s28, 1
          %s201 = smul.addr %s200, 64
          %s202 = scalar_lea.vmem [#allocation2], %s201
          %s203 = smul.u32 8, %s18
          %s205 = ssub.s32 1024, 1024
          %206 = vsyncadd %s199, %s205
          %s207 = smul.addr %s203, 128
          %s208 = scalar_lea.hbm %s0, %s207
          %s209 = sshll.u32 %s202, 4
          %s210 = int_to_ptr.vmem [resolvable:$true] %s209
          %215 = dma.hbm_to_vmem [thread:$0]  %s208, 1024, %s210, %s199, 128, 128, 8
        $region36: #{tpu_custom_call.1} parent=31 // pred_fallthru
          _
      $region32: #{tpu_custom_call.1} parent=5 // pred_fallthru
        _
      %p216 = scmp.le.s32.totalorder 1, %s18
      %p217 = scmp.lt.s32.totalorder %s18, 9
      %p218 = pnand %p216, %p217
      %p219 = pneg %p218
      // Predicated region
      $region37: #{tpu_custom_call.1} parent=5 // pred_check
        _
      $region38: #{tpu_custom_call.1} parent=5 // pred_check_branch
        %221 = sbr.rel (%p218) target = $region40
      $region39: #{tpu_custom_call.1} parent=5 // pred_region
        %s222 = ssub.s32 %s18, 1
        %s223 = sand.u32 %s31, 1
        %s224 = scalar_lea.sflag [#allocation3], %s223
        %s225 = sand.u32 %s31, 1
        %s226 = smul.addr %s225, 64
        %s227 = scalar_lea.vmem [#allocation2], %s226
        // Predicated region
        $region41: #{tpu_custom_call.1} parent=39 // pred_check
          %p228 = pneg %p44
        $region42: #{tpu_custom_call.1} parent=39 // pred_check_branch
          %230 = sbr.rel (%p228) target = $region44
        $region43: #{tpu_custom_call.1} parent=39 // pred_region
          %231 = dma.done %s224, 1024
        $region44: #{tpu_custom_call.1} parent=39 // pred_fallthru
          _
        // Predicated region
        $region45: #{tpu_custom_call.1} parent=39 // pred_check
          %p232 = pneg %p107
        $region46: #{tpu_custom_call.1} parent=39 // pred_check_branch
          %234 = sbr.rel (%p232) target = $region48
        $region47: #{tpu_custom_call.1} parent=39 // pred_region
          %235 = dma.done [#allocation6], 2048
        $region48: #{tpu_custom_call.1} parent=39 // pred_fallthru
          _
        %s236 = sand.u32 %s31, 1
        %s237 = scalar_lea.sflag [#allocation3], %s236
        %s238 = sand.u32 %s31, 1
        %s239 = smul.addr %s238, 64
        %s240 = scalar_lea.vmem [#allocation2], %s239
        %p241 = pneg %p44
        %p242 = pneg %p41
        %p243 = pneg %p65
        %p244 = pneg %p62
        %p245 = pneg %p86
        %p246 = pneg %p83
        %p247 = pneg %p107
        %p248 = pneg %p104
        %p249 = pneg %p128
        %p250 = pneg %p125
        %p251 = pneg %p154
        %p252 = pneg %p151
        %s253 = sand.u32 %s141, 1
        %s254 = scalar_lea.sflag [#allocation4], %s253
        %s255 = sand.u32 %s141, 1
        %s256 = smul.addr %s255, 128
        %s257 = scalar_lea.vmem [#allocation7], %s256
        %s258 = smul.u32 8, %s23
        %s259 = smul.u32 8, %s23
        %v261 = vld [vmem:[%s227] sm:$0xff]
        %v262 = vld [vmem:[%s227 + $0x8] sm:$0xff]
        %v263 = vld [vmem:[%s227 + $0x10] sm:$0xff]
        %v264 = vld [vmem:[%s227 + $0x18] sm:$0xff]
        %v265 = vld [vmem:[%s227 + $0x20] sm:$0xff]
        %v266 = vld [vmem:[%s227 + $0x28] sm:$0xff]
        %v267 = vld [vmem:[%s227 + $0x30] sm:$0xff]
        %v268 = vld [vmem:[%s227 + $0x38] sm:$0xff]
        %269 = vadd.xlane.f32.xlu0 %v261
        %v270 = vpop.xlane.xlu0 %269
        %271 = vadd.xlane.f32.xlu0 %v262
        %v272 = vpop.xlane.xlu0 %271
        %273 = vadd.xlane.f32.xlu0 %v263
        %v274 = vpop.xlane.xlu0 %273
        %275 = vadd.xlane.f32.xlu0 %v264
        %v276 = vpop.xlane.xlu0 %275
        %277 = vadd.xlane.f32.xlu0 %v265
        %v278 = vpop.xlane.xlu0 %277
        %279 = vadd.xlane.f32.xlu0 %v266
        %v280 = vpop.xlane.xlu0 %279
        %281 = vadd.xlane.f32.xlu0 %v267
        %v282 = vpop.xlane.xlu0 %281
        %283 = vadd.xlane.f32.xlu0 %v268
        %v284 = vpop.xlane.xlu0 %283
        %v285 = vrcp.pop 128.0
        %v286 = vmul.f32 %v270, %v285
        %v287 = vmul.f32 %v272, %v285
        %v288 = vmul.f32 %v274, %v285
        %v289 = vmul.f32 %v276, %v285
        %v290 = vmul.f32 %v278, %v285
        %v291 = vmul.f32 %v280, %v285
        %v292 = vmul.f32 %v282, %v285
        %v293 = vmul.f32 %v284, %v285
        %v294 = vsub.f32 %v261, %v286
        %v295 = vsub.f32 %v262, %v287
        %v296 = vsub.f32 %v263, %v288
        %v297 = vsub.f32 %v264, %v289
        %v298 = vsub.f32 %v265, %v290
        %v299 = vsub.f32 %v266, %v291
        %v300 = vsub.f32 %v267, %v292
        %v301 = vsub.f32 %v268, %v293
        %v302 = vmul.f32 %v294, %v294
        %v303 = vmul.f32 %v295, %v295
        %v304 = vmul.f32 %v296, %v296
        %v305 = vmul.f32 %v297, %v297
        %v306 = vmul.f32 %v298, %v298
        %v307 = vmul.f32 %v299, %v299
        %v308 = vmul.f32 %v300, %v300
        %v309 = vmul.f32 %v301, %v301
        %310 = vadd.xlane.f32.xlu0 %v302
        %v311 = vpop.xlane.xlu0 %310
        %312 = vadd.xlane.f32.xlu0 %v303
        %v313 = vpop.xlane.xlu0 %312
        %314 = vadd.xlane.f32.xlu0 %v304
        %v315 = vpop.xlane.xlu0 %314
        %316 = vadd.xlane.f32.xlu0 %v305
        %v317 = vpop.xlane.xlu0 %316
        %318 = vadd.xlane.f32.xlu0 %v306
        %v319 = vpop.xlane.xlu0 %318
        %320 = vadd.xlane.f32.xlu0 %v307
        %v321 = vpop.xlane.xlu0 %320
        %322 = vadd.xlane.f32.xlu0 %v308
        %v323 = vpop.xlane.xlu0 %322
        %324 = vadd.xlane.f32.xlu0 %v309
        %v325 = vpop.xlane.xlu0 %324
        %v326 = vmul.f32 %v311, %v285
        %v327 = vmul.f32 %v313, %v285
        %v328 = vmul.f32 %v315, %v285
        %v329 = vmul.f32 %v317, %v285
        %v330 = vmul.f32 %v319, %v285
        %v331 = vmul.f32 %v321, %v285
        %v332 = vmul.f32 %v323, %v285
        %v333 = vmul.f32 %v325, %v285
        %v334 = vadd.f32 %v326, 1e-05
        %v335 = vadd.f32 %v327, 1e-05
        %v336 = vadd.f32 %v328, 1e-05
        %v337 = vadd.f32 %v329, 1e-05
        %v338 = vadd.f32 %v330, 1e-05
        %v339 = vadd.f32 %v331, 1e-05
        %v340 = vadd.f32 %v332, 1e-05
        %v341 = vadd.f32 %v333, 1e-05
        %v342 = vrsqrt.pop %v334
        %v343 = vrsqrt.pop %v335
        %v344 = vrsqrt.pop %v336
        %v345 = vrsqrt.pop %v337
        %v346 = vrsqrt.pop %v338
        %v347 = vrsqrt.pop %v339
        %v348 = vrsqrt.pop %v340
        %v349 = vrsqrt.pop %v341
        %v350 = vmul.f32 %v294, %v342
        %v351 = vmul.f32 %v295, %v343
        %v352 = vmul.f32 %v296, %v344
        %v353 = vmul.f32 %v297, %v345
        %v354 = vmul.f32 %v298, %v346
        %v355 = vmul.f32 %v299, %v347
        %v356 = vmul.f32 %v300, %v348
        %v357 = vmul.f32 %v301, %v349
        %v358 = vld [vmem:[%s1] sm:$0x1]
        %v360 = vlaneseq
        %v361 = vshrl.u32 %v360, 7
        %v362 = vsub.s32 0, %v361
        %v363 = vrot.slane %v358, %v362
        %v365 = vmul.f32 %v350, %v363
        %v366 = vmul.f32 %v351, %v363
        %v367 = vmul.f32 %v352, %v363
        %v368 = vmul.f32 %v353, %v363
        %v369 = vmul.f32 %v354, %v363
        %v370 = vmul.f32 %v355, %v363
        %v371 = vmul.f32 %v356, %v363
        %v372 = vmul.f32 %v357, %v363
        %v373 = vld [vmem:[%s2] sm:$0x1]
        %v375 = vlaneseq
        %v376 = vshrl.u32 %v375, 7
        %v377 = vsub.s32 0, %v376
        %v378 = vrot.slane %v373, %v377
        %v380 = vadd.f32 %v365, %v378
        %v381 = vadd.f32 %v366, %v378
        %v382 = vadd.f32 %v367, %v378
        %v383 = vadd.f32 %v368, %v378
        %v384 = vadd.f32 %v369, %v378
        %v385 = vadd.f32 %v370, %v378
        %v386 = vadd.f32 %v371, %v378
        %v387 = vadd.f32 %v372, %v378
        %v388 = vpack.c.bf16 %v381, %v380
        %v389 = vpack.c.bf16 %v383, %v382
        %v390 = vpack.c.bf16 %v385, %v384
        %v391 = vpack.c.bf16 %v387, %v386
        %v392 = vld [vmem:[#allocation5] sm:$0xff]
        %v393 = vld [vmem:[#allocation5 + $0x8] sm:$0xff]
        %v394 = vld [vmem:[#allocation5 + $0x10] sm:$0xff]
        %v395 = vld [vmem:[#allocation5 + $0x18] sm:$0xff]
        %v396 = vld [vmem:[#allocation5 + $0x20] sm:$0xff]
        %v397 = vld [vmem:[#allocation5 + $0x28] sm:$0xff]
        %v398 = vld [vmem:[#allocation5 + $0x30] sm:$0xff]
        %v399 = vld [vmem:[#allocation5 + $0x38] sm:$0xff]
        %v400 = vld [vmem:[#allocation5 + $0x40] sm:$0xff]
        %v401 = vld [vmem:[#allocation5 + $0x48] sm:$0xff]
        %v402 = vld [vmem:[#allocation5 + $0x50] sm:$0xff]
        %v403 = vld [vmem:[#allocation5 + $0x58] sm:$0xff]
        %v404 = vld [vmem:[#allocation5 + $0x60] sm:$0xff]
        %v405 = vld [vmem:[#allocation5 + $0x68] sm:$0xff]
        %v406 = vld [vmem:[#allocation5 + $0x70] sm:$0xff]
        %v407 = vld [vmem:[#allocation5 + $0x78] sm:$0xff]
        %v408 = vld [vmem:[%s4] sm:$0x3]
        %v410 = vlaneseq
        %v411 = vshrl.u32 %v410, 7
        %v412 = vsub.s32 0, %v411
        %v413 = vrot.slane %v408, %v412
        %v414 = vlaneseq
        %v415 = vshrl.u32 %v414, 7
        %v416 = vsub.s32 1, %v415
        %v417 = vrot.slane %v408, %v416
        %v436 = vunpack.c.l.b16 %v392
        %v437 = vunpack.c.h.b16 %v392
        %v438 = vunpack.c.l.b16 %v393
        %v439 = vunpack.c.h.b16 %v393
        %v440 = vunpack.c.l.b16 %v394
        %v441 = vunpack.c.h.b16 %v394
        %v442 = vunpack.c.l.b16 %v395
        %v443 = vunpack.c.h.b16 %v395
        %v444 = vunpack.c.l.b16 %v396
        %v445 = vunpack.c.h.b16 %v396
        %v446 = vunpack.c.l.b16 %v397
        %v447 = vunpack.c.h.b16 %v397
        %v448 = vunpack.c.l.b16 %v398
        %v449 = vunpack.c.h.b16 %v398
        %v450 = vunpack.c.l.b16 %v399
        %v451 = vunpack.c.h.b16 %v399
        %v452 = vunpack.c.l.b16 %v400
        %v453 = vunpack.c.h.b16 %v400
        %v454 = vunpack.c.l.b16 %v401
        %v455 = vunpack.c.h.b16 %v401
        %v456 = vunpack.c.l.b16 %v402
        %v457 = vunpack.c.h.b16 %v402
        %v458 = vunpack.c.l.b16 %v403
        %v459 = vunpack.c.h.b16 %v403
        %v460 = vunpack.c.l.b16 %v404
        %v461 = vunpack.c.h.b16 %v404
        %v462 = vunpack.c.l.b16 %v405
        %v463 = vunpack.c.h.b16 %v405
        %v464 = vunpack.c.l.b16 %v406
        %v465 = vunpack.c.h.b16 %v406
        %v466 = vunpack.c.l.b16 %v407
        %v467 = vunpack.c.h.b16 %v407
        %v468 = vpack.c.b16 %v438, %v436
        %v469 = vpack.c.b16 %v439, %v437
        %v470 = vpack.c.b16 %v442, %v440
        %v471 = vpack.c.b16 %v443, %v441
        %v472 = vpack.c.b16 %v446, %v444
        %v473 = vpack.c.b16 %v447, %v445
        %v474 = vpack.c.b16 %v450, %v448
        %v475 = vpack.c.b16 %v451, %v449
        %v476 = vpack.c.b16 %v454, %v452
        %v477 = vpack.c.b16 %v455, %v453
        %v478 = vpack.c.b16 %v458, %v456
        %v479 = vpack.c.b16 %v459, %v457
        %v480 = vpack.c.b16 %v462, %v460
        %v481 = vpack.c.b16 %v463, %v461
        %v482 = vpack.c.b16 %v466, %v464
        %v483 = vpack.c.b16 %v467, %v465
        %500 = vmatprep.subr.bf16.mxu0 %v469
        %501 = vmatpush1.bf16.msra.mxu0 %v468
        %502 = vmatprep.subr.bf16.mxu0 %v471
        %503 = vmatpush1.bf16.msra.mxu0 %v470
        %504 = vmatprep.subr.bf16.mxu0 %v473
        %505 = vmatpush1.bf16.msra.mxu0 %v472
        %506 = vmatprep.subr.bf16.mxu0 %v475
        %507 = vmatpush1.bf16.msra.mxu0 %v474
        %508 = vmatprep.subr.bf16.mxu0 %v477
        %509 = vmatpush1.bf16.msra.mxu0 %v476
        %510 = vmatprep.subr.bf16.mxu0 %v479
        %511 = vmatpush1.bf16.msra.mxu0 %v478
        %512 = vmatprep.subr.bf16.mxu0 %v481
        %513 = vmatpush1.bf16.msra.mxu0 %v480
        %514 = vmatprep.subr.bf16.mxu0 %v483
        %515 = vmatpush1.bf16.msra.mxu0 %v482
        %516 = vmatprep.subr.bf16.mxu0 0
        %517 = vmatpush1.bf16.msra.mxu0 0
        %518 = vmatprep.subr.bf16.mxu0 0
        %519 = vmatpush1.bf16.msra.mxu0 0
        %520 = vmatprep.subr.bf16.mxu0 0
        %521 = vmatpush1.bf16.msra.mxu0 0
        %522 = vmatprep.subr.bf16.mxu0 0
        %523 = vmatpush1.bf16.msra.mxu0 0
        %524 = vmatprep.subr.bf16.mxu0 0
        %525 = vmatpush1.bf16.msra.mxu0 0
        %526 = vmatprep.subr.bf16.mxu0 0
        %527 = vmatpush1.bf16.msra.mxu0 0
        %528 = vmatprep.subr.bf16.mxu0 0
        %529 = vmatpush1.bf16.msra.mxu0 0
        %530 = vmatprep.subr.bf16.mxu0 0
        %531 = vmatpush1.bf16.msra.mxu0 0
        %532 = vmatprep.mubr.bf16.mxu0 0
        %533 = vmatmul.mubr.bf16.gmra.mrb[0].mxu0 %v388
        %v534 = vpop.f32.mrb[0].mxu0
        %v535 = vadd.f32 %v413, %v534
        %v536 = vpop.f32.mrb[0].mxu0
        %v537 = vadd.f32 %v417, %v536
        %v538 = vpop.f32.mrb[0].mxu0
        %v539 = vadd.f32 %v413, %v538
        %v540 = vpop.f32.mrb[0].mxu0
        %v541 = vadd.f32 %v417, %v540
        %542 = vmatprep.mubr.bf16.mxu0 0
        %543 = vmatmul.mubr.bf16.gmra.mrb[0].mxu0 %v389
        %v544 = vpop.f32.mrb[0].mxu0
        %v545 = vadd.f32 %v413, %v544
        %v546 = vpop.f32.mrb[0].mxu0
        %v547 = vadd.f32 %v417, %v546
        %v548 = vpop.f32.mrb[0].mxu0
        %v549 = vadd.f32 %v413, %v548
        %v550 = vpop.f32.mrb[0].mxu0
        %v551 = vadd.f32 %v417, %v550
        %552 = vmatprep.mubr.bf16.mxu0 0
        %553 = vmatmul.mubr.bf16.gmra.mrb[0].mxu0 %v390
        %v554 = vpop.f32.mrb[0].mxu0
        %v555 = vadd.f32 %v413, %v554
        %v556 = vpop.f32.mrb[0].mxu0
        %v557 = vadd.f32 %v417, %v556
        %v558 = vpop.f32.mrb[0].mxu0
        %v559 = vadd.f32 %v413, %v558
        %v560 = vpop.f32.mrb[0].mxu0
        %v561 = vadd.f32 %v417, %v560
        %562 = vmatprep.mubr.bf16.mxu0 0
        %563 = vmatmul.mubr.bf16.gmra.mrb[0].mxu0 %v391
        %v564 = vpop.f32.mrb[0].mxu0
        %v565 = vadd.f32 %v413, %v564
        %v566 = vpop.f32.mrb[0].mxu0
        %v567 = vadd.f32 %v417, %v566
        %v568 = vpop.f32.mrb[0].mxu0
        %v569 = vadd.f32 %v413, %v568
        %v570 = vpop.f32.mrb[0].mxu0
        %v571 = vadd.f32 %v417, %v570
        %572 = vdwg.mxu0
        %573 = vst [vmem:[%s257] sm:$0xff] %v535
        %574 = vst [vmem:[%s257 + $0x8] sm:$0xff] %v537
        %575 = vst [vmem:[%s257 + $0x10] sm:$0xff] %v539
        %576 = vst [vmem:[%s257 + $0x18] sm:$0xff] %v541
        %577 = vst [vmem:[%s257 + $0x20] sm:$0xff] %v545
        %578 = vst [vmem:[%s257 + $0x28] sm:$0xff] %v547
        %579 = vst [vmem:[%s257 + $0x30] sm:$0xff] %v549
        %580 = vst [vmem:[%s257 + $0x38] sm:$0xff] %v551
        %581 = vst [vmem:[%s257 + $0x40] sm:$0xff] %v555
        %582 = vst [vmem:[%s257 + $0x48] sm:$0xff] %v557
        %583 = vst [vmem:[%s257 + $0x50] sm:$0xff] %v559
        %584 = vst [vmem:[%s257 + $0x58] sm:$0xff] %v561
        %585 = vst [vmem:[%s257 + $0x60] sm:$0xff] %v565
        %586 = vst [vmem:[%s257 + $0x68] sm:$0xff] %v567
        %587 = vst [vmem:[%s257 + $0x70] sm:$0xff] %v569
        %588 = vst [vmem:[%s257 + $0x78] sm:$0xff] %v571
        %s589 = sand.u32 %s141, 1
        %s590 = scalar_lea.sflag [#allocation4], %s589
        %s591 = sand.u32 %s141, 1
        %s592 = smul.addr %s591, 128
        %s593 = scalar_lea.vmem [#allocation7], %s592
        // Predicated region
        $region49: #{tpu_custom_call.1} parent=39 // pred_check
          %p594 = pneg %p151
        $region50: #{tpu_custom_call.1} parent=39 // pred_check_branch
          %596 = sbr.rel (%p594) target = $region52
        $region51: #{tpu_custom_call.1} parent=39 // pred_region
          %s597 = smul.u32 8, %s23
          %s599 = ssub.s32 2048, 2048
          %600 = vsyncadd %s590, %s599
          %s601 = smul.addr %s597, 2
          %s602 = smul.addr %s601, 128
          %s603 = scalar_lea.hbm %s5, %s602
          %s604 = sshll.u32 %s593, 4
          %s605 = int_to_ptr.vmem [resolvable:$true] %s604
          %610 = dma.vmem_to_hbm [thread:$0]  %s605, 2048, %s603, %s590, 256, 256, 16
        $region52: #{tpu_custom_call.1} parent=39 // pred_fallthru
          _
      $region40: #{tpu_custom_call.1} parent=5 // pred_fallthru
        _
      %p611 = scmp.le.s32.totalorder 2, %s18
      // Predicated region
      $region53: #{tpu_custom_call.1} parent=5 // pred_check
        %p612 = pneg %p611
      $region54: #{tpu_custom_call.1} parent=5 // pred_check_branch
        %614 = sbr.rel (%p612) target = $region56
      $region55: #{tpu_custom_call.1} parent=5 // pred_region
        %s615 = ssub.s32 %s18, 2
        // Predicated region
        $region57: #{tpu_custom_call.1} parent=55 // pred_check
          %p616 = pneg %p157
        $region58: #{tpu_custom_call.1} parent=55 // pred_check_branch
          %618 = sbr.rel (%p616) target = $region60
        $region59: #{tpu_custom_call.1} parent=55 // pred_region
          %s619 = sand.u32 %s142, 1
          %s620 = scalar_lea.sflag [#allocation4], %s619
          %s621 = sand.u32 %s142, 1
          %s622 = smul.addr %s621, 128
          %s623 = scalar_lea.vmem [#allocation7], %s622
          %624 = dma.done %s620, 2048
        $region60: #{tpu_custom_call.1} parent=55 // pred_fallthru
          _
      $region56: #{tpu_custom_call.1} parent=5 // pred_fallthru
        _
    $region6: #{tpu_custom_call.1} parent=1 // loop_footer
      %s22 = sadd.s32 1, %s18
    $region7: #{tpu_custom_call.1} parent=1 // loop_footer_branch
      %17 = sbr.rel target = $region3
    $region8: #{tpu_custom_call.1} parent=1 // loop_exit
      _
    %625 = vsyncpa [#allocation3], 1
    %s626 = scalar_lea.sflag [#allocation3], 1
    %627 = vsyncpa %s626, 1
    %628 = vsyncpa [#allocation6], 1
    %629 = vsyncpa [#allocation4], 1
    %s630 = scalar_lea.sflag [#allocation4], 1
    %631 = vsyncpa %s630, 1

</llo_original>
